<compile_context>
chip_gen: v7x
topology: tpu7x:2x2x1
jax: 0.10.0
libtpu: 0.0.40
codegen_flags: <defaults>
</compile_context>

<pallas_src>
import jax
import jax.numpy as jnp
from jax import lax
from jax.experimental import pallas as pl
from jax.experimental.pallas import tpu as pltpu

ALPHA = 0.8  # StarE triple-vs-qualifier mixing weight for the "sum" aggregation


def _round_up(n, m):
    return ((n + m - 1) // m) * m


def _pad2d(a, rows, cols, dtype=None):
    a = jnp.pad(a, ((0, rows - a.shape[0]), (0, cols - a.shape[1])))
    return a.astype(dtype) if dtype is not None else a


def _vmem_limit_bytes(frac=0.85, fallback=64 * 1024 * 1024):
    # v5e/v6e: 128 MiB physical -> ~109 MiB budget; v7x: 64 MiB -> ~54 MiB.
    try:
        cap = int(pltpu.get_tpu_info().vmem_capacity_bytes)
    except Exception:
        cap = fallback
    return max(32 * 1024 * 1024, int(cap * frac))


def _stare_conv_kernel(
    # scalar prefetch (SMEM): per-tile metadata, O(n_tiles) not O(E)
    _tile_node_ref, _tile_dir_ref, tile_first_ref, tile_last_ref,
    # streamed / resident VMEM operands
    xe_src_ref,    # (ET, D_pad) bf16, degree weight already folded in
    xr_ref,        # (ET, D_pad) bf16, alpha*x_r[rel] + qualifier projection
    dst_ref,       # (1, ET) int32, target index local to this node block (-1 = pad)
    w_ref,         # (D_pad, O_pad) bf16, (1/3)*w_in or (1/3)*w_out (per-tile select)
    seed_ref,      # (NT, O_pad) f32, (1/3)*(x_e*loop_rel)@w_loop for this node block
    bn_scale_ref, bn_shift_ref,   # (1, O_pad) f32 (bias folded into bn_shift)
    # output: (NT, O_pad) f32 accumulator, resident across this node block's tiles
    out_ref,
):
    f32, bf16 = jnp.float32, jnp.bfloat16
    t = pl.program_id(0)
    et = xe_src_ref.shape[0]
    nt = out_ref.shape[0]

    # First tile of this node block: seed with the self-loop term (computed in XLA).
    @pl.when(tile_first_ref[t] == 1)
    def _init():
        out_ref[...] = seed_ref[...]

    # Message:  (wmsg * x_e[src]) * xr  @  (1/3 * W_dir)   -- bf16 MXU, f32 accum.
    comp = xe_src_ref[...] * xr_ref[...]                               # (ET, D_pad) bf16
    msg = jnp.dot(comp, w_ref[...], preferred_element_type=f32)        # (ET, O_pad) f32

    # Scatter-as-matmul: local one-hot (exact 0/1 in bf16), second MXU matmul.
    node_ids = lax.broadcasted_iota(jnp.int32, (nt, et), 0)
    onehot = (dst_ref[...] == node_ids).astype(bf16)                   # (NT, ET)
    out_ref[...] += jnp.dot(onehot, msg.astype(bf16),
                            preferred_element_type=f32)                # (NT, O_pad)

    # Last tile of this node block: bias (folded) + batch-norm (eval) + ReLU.
    @pl.when(tile_last_ref[t] == 1)
    def _finalize():
        y = out_ref[...] * bn_scale_ref[...] + bn_shift_ref[...]
        out_ref[...] = jnp.maximum(y, 0.0)


def init_params(key, input_dim, output_dim):
    ks = jax.random.split(key, 8)
    glorot = jax.nn.initializers.glorot_normal()
    f32 = jnp.float32
    return {
        "w_loop": glorot(ks[0], (input_dim, output_dim), f32),
        "w_in": glorot(ks[1], (input_dim, output_dim), f32),
        "w_out": glorot(ks[2], (input_dim, output_dim), f32),
        "w_rel": glorot(ks[3], (input_dim, output_dim), f32),
        "loop_rel": glorot(ks[4], (1, input_dim), f32),
        "w_q": glorot(ks[5], (input_dim, input_dim), f32),   # qualifier-aggregation linear
        "bias": jnp.zeros((output_dim,), f32),
        "bn_gamma": 1.0 + 0.01 * jnp.arange(output_dim, dtype=f32),
        "bn_beta": 0.01 * jnp.arange(output_dim, dtype=f32),
        "bn_mean": jnp.zeros((output_dim,), f32),
        "bn_var": jnp.ones((output_dim,), f32),
    }


def stare_conv_forward(params, x_e, x_r, edge_index, edge_type,
                       qualifier_index, entity_mask=None, *,
                       edge_tile=1024, node_tile=256):
    f32, bf16, i32 = jnp.float32, jnp.bfloat16, jnp.int32
    N, D = x_e.shape
    R = x_r.shape[0] // 2
    E = edge_index.shape[1]
    O = params["w_loop"].shape[1]

    D_pad = _round_up(D, 128)
    O_pad = _round_up(O, 128)
    ET = max(128, _round_up(edge_tile, 128))         # edge tile (sweep 1024-2048)
    NT = min(_round_up(node_tile, 8), _round_up(N, 8))
    N_pad = _round_up(N, NT)
    NN = N_pad // NT                                  # number of node blocks
    E2 = 2 * E                                        # directed edges (fwd + inv)
    n_groups = 2 * NN                                 # (node block, direction) groups
    n_tiles = -(-E2 // ET) + n_groups                 # static upper bound on tiles
    P = n_tiles * ET

    x_e = x_e.astype(f32)
    x_r = x_r.astype(f32)

    # ---- qualifier aggregation, projected in the wrapper (O(Q*D^2) + O(Q*D)) ----
    i_qr, i_qe, i_e = qualifier_index[0], qualifier_index[1], qualifier_index[2]
    x_q = x_e[i_qe] * x_r[i_qr]                                          # (Q, D)
    q_proj = jax.ops.segment_sum(x_q @ ((1.0 - ALPHA) * params["w_q"]),
                                 i_e, num_segments=E)                    # (E, D)

    # ---- per-direction gathers; degree weight folded into x_e[src] in f32 -------
    src, tgt = edge_index[0], edge_index[1]

    def direction(src_idx, tgt_idx, rel_idx):
        deg = jax.ops.segment_sum(jnp.ones((E,), f32), tgt_idx, num_segments=N)
        inv_sqrt = jnp.where(deg > 0, lax.rsqrt(jnp.maximum(deg, 1e-12)), 0.0)
        wmsg = inv_sqrt[src_idx] * inv_sqrt[tgt_idx]                     # (E,)
        xe_src = x_e[src_idx] * wmsg[:, None]                            # (E, D) f32
        xr_edge = ALPHA * x_r[rel_idx] + q_proj                          # (E, D) f32
        return xe_src, xr_edge, tgt_idx

    xe_in, xr_in, dst_in = direction(src, tgt, edge_type)
    xe_out, xr_out, dst_out = direction(tgt, src, edge_type + R)

    xe_all = jnp.concatenate([xe_in, xe_out], axis=0)                    # (2E, D)
    xr_all = jnp.concatenate([xr_in, xr_out], axis=0)
    dst_all = jnp.concatenate([dst_in, dst_out], axis=0).astype(i32)
    dir_all = jnp.concatenate([jnp.zeros((E,), i32), jnp.ones((E,), i32)])

    # ---- partition directed edges by (destination node block, direction) --------
    group = (dst_all // NT) * 2 + dir_all                                # in [0, 2*NN)
    counts = jax.ops.segment_sum(jnp.ones((E2,), i32), group, num_segments=n_groups)
    tiles_per_group = (counts + ET - 1) // ET
    block_tiles = tiles_per_group.reshape(NN, 2).sum(axis=1)
    # every node block needs >= 1 tile so its seed / BN / ReLU still happen
    tiles_per_group = tiles_per_group.at[::2].add((block_tiles == 0).astype(i32))
    group_end = jnp.cumsum(tiles_per_group)
    group_tile_start = group_end - tiles_per_group

    order = jnp.argsort(group)
    group_edge_start = jnp.cumsum(counts) - counts
    rank_sorted = jnp.arange(E2, dtype=i32) - group_edge_start[group[order]]
    slot_sorted = group_tile_start[group[order]] * ET + rank_sorted
    slot = jnp.zeros((E2,), i32).at[order].set(slot_sorted.astype(i32))  # slot per edge

    # per-tile metadata (SMEM scalar prefetch; O(n_tiles), not O(E))
    tile_idx = jnp.arange(n_tiles, dtype=i32)
    tile_group = jnp.searchsorted(group_end, tile_idx, side="right").astype(i32)
    is_leftover = tile_group >= n_groups               # unused trailing tile slots
    tg = jnp.minimum(tile_group, n_groups - 1)
    tile_node = jnp.where(is_leftover, NN - 1, tg // 2).astype(i32)
    tile_dir = jnp.where(is_leftover, 0, tg % 2).astype(i32)
    prev_node = jnp.concatenate([jnp.full((1,), -1, i32), tile_node[:-1]])
    tile_first = ((tile_node != prev_node) & (~is_leftover)).astype(i32)
    nxt_same_real = jnp.concatenate(
        [(tile_node[1:] == tile_node[:-1]) & (~is_leftover[1:]),
         jnp.zeros((1,), bool)])
    tile_last = ((~is_leftover) & (~nxt_same_real)).astype(i32)

    # ---- padded, partitioned per-edge payloads (padding rows are exact zeros) ---
    def pad_cols(a):
        return jnp.pad(a, ((0, 0), (0, D_pad - D)))

    xe_pad = jnp.zeros((P, D_pad), bf16).at[slot].set(pad_cols(xe_all).astype(bf16))
    xr_pad = jnp.zeros((P, D_pad), bf16).at[slot].set(pad_cols(xr_all).astype(bf16))
    dst_pad = (jnp.full((P,), -1, i32).at[slot].set(dst_all % NT)
               .reshape(n_tiles, 1, ET))

    # ---- constant folding --------------------------------------------------------
    eps = 1e-5
    bn_scale = params["bn_gamma"] / jnp.sqrt(params["bn_var"] + eps)
    bn_shift = params["bn_beta"] + (params["bias"] - params["bn_mean"]) * bn_scale
    third = 1.0 / 3.0

    w_stack = jnp.stack([
        _pad2d(third * params["w_in"], D_pad, O_pad, bf16),
        _pad2d(third * params["w_out"], D_pad, O_pad, bf16),
    ], axis=0)                                                           # (2, Dp, Op)

    seed = (x_e * params["loop_rel"]) @ (third * params["w_loop"])       # (N, O) f32
    seed_p = _pad2d(seed, N_pad, O_pad, f32)
    bn_scale_p = _pad2d(bn_scale[None, :], 1, O_pad, f32)
    bn_shift_p = _pad2d(bn_shift[None, :], 1, O_pad, f32)

    grid_spec = pltpu.PrefetchScalarGridSpec(
        num_scalar_prefetch=4,
        grid=(n_tiles,),
        in_specs=[
            pl.BlockSpec((ET, D_pad), lambda t, *_: (t, 0)),             # xe_src (wmsg folded)
            pl.BlockSpec((ET, D_pad), lambda t, *_: (t, 0)),             # xr (rel + qualifiers)
            pl.BlockSpec((None, 1, ET), lambda t, *_: (t, 0, 0)),        # local target ids
            pl.BlockSpec((None, D_pad, O_pad),
                         lambda t, tn, td, tf, tl: (td[t], 0, 0)),       # (1/3)*w_in / w_out
            pl.BlockSpec((NT, O_pad),
                         lambda t, tn, td, tf, tl: (tn[t], 0)),          # self-loop seed
            pl.BlockSpec((1, O_pad), lambda t, *_: (0, 0)),              # bn_scale
            pl.BlockSpec((1, O_pad), lambda t, *_: (0, 0)),              # bn_shift (+bias)
        ],
        out_specs=pl.BlockSpec((NT, O_pad),
                               lambda t, tn, td, tf, tl: (tn[t], 0)),
    )

    out_pad = pl.pallas_call(
        _stare_conv_kernel,
        grid_spec=grid_spec,
        out_shape=jax.ShapeDtypeStruct((N_pad, O_pad), f32),
        compiler_params=pltpu.CompilerParams(
            dimension_semantics=("arbitrary",),    # sequential accumulation axis
            vmem_limit_bytes=_vmem_limit_bytes(),
        ),
    )(
        tile_node, tile_dir, tile_first, tile_last,
        xe_pad, xr_pad, dst_pad, w_stack, seed_p, bn_scale_p, bn_shift_p,
    )

    out_e = out_pad[:N, :O]
    out_r = x_r @ params["w_rel"]                   # tiny; plain XLA

    if entity_mask is not None:
        if O != D:
            raise ValueError("entity_mask path requires output_dim == input_dim "
                             "(out[mask] = x_e[mask]), as in the reference module")
        keep = jnp.zeros((N,), dtype=bool).at[entity_mask].set(True)
        out_e = jnp.where(keep[:, None], x_e, out_e)
    return out_e, out_r


if __name__ == "__main__":
    key = jax.random.PRNGKey(0)
    k_param, k_xe, k_xr, k_src, k_tgt, k_et, k_qr, k_qe, k_qedge = jax.random.split(key, 9)

    num_entities, input_dim, output_dim = 32, 32, 32
    num_relations, num_edges, num_qual = 4, 16, 8

    params = init_params(k_param, input_dim, output_dim)

    x_e = jax.random.normal(k_xe, (num_entities, input_dim), jnp.float32)
    x_r = jax.random.normal(k_xr, (2 * num_relations, input_dim), jnp.float32)
    edge_index = jnp.stack([
        jax.random.randint(k_src, (num_edges,), 0, num_entities),
        jax.random.randint(k_tgt, (num_edges,), 0, num_entities),
    ], axis=0)                                                        # (2, E)
    edge_type = jax.random.randint(k_et, (num_edges,), 0, num_relations)   # (E,)
    qualifier_index = jnp.stack([
        jax.random.randint(k_qr, (num_qual,), 0, 2 * num_relations),  # qualifier relation id
        jax.random.randint(k_qe, (num_qual,), 0, num_entities),       # qualifier entity id
        jax.random.randint(k_qedge, (num_qual,), 0, num_edges),       # edge id
    ], axis=0)                                                        # (3, Q)
    entity_mask = jnp.array([0, 5, 17], dtype=jnp.int32)

    out_e, out_r = stare_conv_forward(
        params, x_e, x_r, edge_index, edge_type, qualifier_index, entity_mask)
    jax.block_until_ready((out_e, out_r))

    assert out_e.shape == (num_entities, output_dim)
    assert out_r.shape == (2 * num_relations, output_dim)
    assert bool(jnp.all(jnp.isfinite(out_e))) and bool(jnp.all(jnp.isfinite(out_r)))
    print("KERNEL_OK")
</pallas_src>

<mosaic_0001>
module attributes {stable_mosaic.version = 11 : i64} {
  func.func @_stare_conv_kernel(%arg0: i32, %arg1: memref<3xi32, #tpu.memory_space<smem>>, %arg2: memref<3xi32, #tpu.memory_space<smem>>, %arg3: memref<3xi32, #tpu.memory_space<smem>>, %arg4: memref<3xi32, #tpu.memory_space<smem>>, %arg5: memref<1024x128xbf16, #tpu.memory_space<vmem>>, %arg6: memref<1024x128xbf16, #tpu.memory_space<vmem>>, %arg7: memref<1x1x1024xi32, #tpu.memory_space<vmem>>, %arg8: memref<1x128x128xbf16, #tpu.memory_space<vmem>>, %arg9: memref<32x128xf32, #tpu.memory_space<vmem>>, %arg10: memref<1x128xf32, #tpu.memory_space<vmem>>, %arg11: memref<1x128xf32, #tpu.memory_space<vmem>>, %arg12: memref<32x128xf32, #tpu.memory_space<vmem>>) attributes {dimension_semantics = [#tpu.dimension_semantics<arbitrary>], iteration_bounds = array<i64: 3>, scalar_prefetch = 4 : i64, scratch_operands = 0 : i64, tpu.core_type = #tpu.core_type<tc>, window_params = [{transform_indices = @transform_0, window_bounds = array<i64: 1024, 128>}, {transform_indices = @transform_1, window_bounds = array<i64: 1024, 128>}, {transform_indices = @transform_2, window_bounds = array<i64: 1, 1, 1024>}, {transform_indices = @transform_3, window_bounds = array<i64: 1, 128, 128>}, {transform_indices = @transform_4, window_bounds = array<i64: 32, 128>}, {pipeline_mode = #tpu.pipeline_mode<synchronous>, transform_indices = @transform_5, window_bounds = array<i64: 1, 128>}, {pipeline_mode = #tpu.pipeline_mode<synchronous>, transform_indices = @transform_6, window_bounds = array<i64: 1, 128>}, {transform_indices = @transform_7, window_bounds = array<i64: 32, 128>}]} {
    %0 = arith.index_cast %arg0 : i32 to index
    %1 = memref.load %arg3[%0] : memref<3xi32, #tpu.memory_space<smem>>
    %c1_i32 = arith.constant 1 : i32
    %2 = arith.cmpi eq, %1, %c1_i32 : i32
    %3 = arith.extui %2 : i1 to i32
    %c0_i32 = arith.constant 0 : i32
    %4 = arith.cmpi ne, %3, %c0_i32 : i32
    scf.if %4 {
      %c0_16 = arith.constant 0 : index
      %c0_17 = arith.constant 0 : index
      %29 = vector.load %arg9[%c0_16, %c0_17] : memref<32x128xf32, #tpu.memory_space<vmem>>, vector<32x128xf32>
      %c0_18 = arith.constant 0 : index
      %c0_19 = arith.constant 0 : index
      %30 = vector.load %arg12[%c0_18, %c0_19] : memref<32x128xf32, #tpu.memory_space<vmem>>, vector<32x128xf32>
      tpu.vector_store %arg12[%c0_18, %c0_19], %29 {strides = array<i32>} : memref<32x128xf32, #tpu.memory_space<vmem>>, vector<32x128xf32>,
    } else {
    }
    %c0 = arith.constant 0 : index
    %c0_0 = arith.constant 0 : index
    %5 = vector.load %arg5[%c0, %c0_0] : memref<1024x128xbf16, #tpu.memory_space<vmem>>, vector<1024x128xbf16>
    %c0_1 = arith.constant 0 : index
    %c0_2 = arith.constant 0 : index
    %6 = vector.load %arg6[%c0_1, %c0_2] : memref<1024x128xbf16, #tpu.memory_space<vmem>>, vector<1024x128xbf16>
    %7 = arith.mulf %5, %6 : vector<1024x128xbf16>
    %c0_3 = arith.constant 0 : index
    %c0_4 = arith.constant 0 : index
    %c0_5 = arith.constant 0 : index
    %8 = vector.load %arg8[%c0_3, %c0_4, %c0_5] : memref<1x128x128xbf16, #tpu.memory_space<vmem>>, vector<1x128x128xbf16>
    %9 = vector.shape_cast %8 : vector<1x128x128xbf16> to vector<128x128xbf16>
    %cst = arith.constant dense<0.000000e+00> : vector<1024x128xf32>
    %10 = tpu.matmul %7, %9, %cst {dimension_numbers = #tpu.dot_dimension_numbers<[1], [0], [0], [1], [0, 0, 1, 1], [], []>} : vector<1024x128xbf16>, vector<128x128xbf16>, vector<1024x128xf32> -> vector<1024x128xf32>
    %11 = tpu.iota {dimensions = array<i32: 0>} : vector<32x1024xi32>
    %c0_6 = arith.constant 0 : index
    %c0_7 = arith.constant 0 : index
    %c0_8 = arith.constant 0 : index
    %12 = vector.load %arg7[%c0_6, %c0_7, %c0_8] : memref<1x1x1024xi32, #tpu.memory_space<vmem>>, vector<1x1x1024xi32>
    %13 = vector.shape_cast %12 : vector<1x1x1024xi32> to vector<1x1024xi32>
    %14 = vector.broadcast %13 : vector<1x1024xi32> to vector<32x1024xi32>
    %15 = arith.cmpi eq, %14, %11 : vector<32x1024xi32>
    %16 = arith.extui %15 : vector<32x1024xi1> to vector<32x1024xi32>
    %17 = arith.sitofp %16 : vector<32x1024xi32> to vector<32x1024xf32>
    %18 = arith.truncf %17 : vector<32x1024xf32> to vector<32x1024xbf16>
    %c0_9 = arith.constant 0 : index
    %c0_10 = arith.constant 0 : index
    %19 = vector.load %arg12[%c0_9, %c0_10] : memref<32x128xf32, #tpu.memory_space<vmem>>, vector<32x128xf32>
    %20 = arith.truncf %10 : vector<1024x128xf32> to vector<1024x128xbf16>
    %cst_11 = arith.constant dense<0.000000e+00> : vector<32x128xf32>
    %21 = tpu.matmul %18, %20, %cst_11 {dimension_numbers = #tpu.dot_dimension_numbers<[1], [0], [0], [1], [0, 0, 1, 1], [], []>} : vector<32x1024xbf16>, vector<1024x128xbf16>, vector<32x128xf32> -> vector<32x128xf32>
    %22 = arith.addf %19, %21 : vector<32x128xf32>
    %c0_12 = arith.constant 0 : index
    %c0_13 = arith.constant 0 : index
    %23 = vector.load %arg12[%c0_12, %c0_13] : memref<32x128xf32, #tpu.memory_space<vmem>>, vector<32x128xf32>
    tpu.vector_store %arg12[%c0_12, %c0_13], %22 {strides = array<i32>} : memref<32x128xf32, #tpu.memory_space<vmem>>, vector<32x128xf32>,
    %24 = arith.index_cast %arg0 : i32 to index
    %25 = memref.load %arg4[%24] : memref<3xi32, #tpu.memory_space<smem>>
    %c1_i32_14 = arith.constant 1 : i32
    %26 = arith.cmpi eq, %25, %c1_i32_14 : i32
    %27 = arith.extui %26 : i1 to i32
    %c0_i32_15 = arith.constant 0 : i32
    %28 = arith.cmpi ne, %27, %c0_i32_15 : i32
    scf.if %28 {
      %c0_16 = arith.constant 0 : index
      %c0_17 = arith.constant 0 : index
      %29 = vector.load %arg12[%c0_16, %c0_17] : memref<32x128xf32, #tpu.memory_space<vmem>>, vector<32x128xf32>
      %c0_18 = arith.constant 0 : index
      %c0_19 = arith.constant 0 : index
      %30 = vector.load %arg10[%c0_18, %c0_19] : memref<1x128xf32, #tpu.memory_space<vmem>>, vector<1x128xf32>
      %31 = vector.broadcast %30 : vector<1x128xf32> to vector<32x128xf32>
      %32 = arith.mulf %29, %31 : vector<32x128xf32>
      %c0_20 = arith.constant 0 : index
      %c0_21 = arith.constant 0 : index
      %33 = vector.load %arg11[%c0_20, %c0_21] : memref<1x128xf32, #tpu.memory_space<vmem>>, vector<1x128xf32>
      %34 = vector.broadcast %33 : vector<1x128xf32> to vector<32x128xf32>
      %35 = arith.addf %32, %34 : vector<32x128xf32>
      %cst_22 = arith.constant 0.000000e+00 : f32
      %36 = vector.broadcast %cst_22 : f32 to vector<32x128xf32>
      %37 = arith.maximumf %35, %36 : vector<32x128xf32>
      %c0_23 = arith.constant 0 : index
      %c0_24 = arith.constant 0 : index
      %38 = vector.load %arg12[%c0_23, %c0_24] : memref<32x128xf32, #tpu.memory_space<vmem>>, vector<32x128xf32>
      tpu.vector_store %arg12[%c0_23, %c0_24], %37 {strides = array<i32>} : memref<32x128xf32, #tpu.memory_space<vmem>>, vector<32x128xf32>,
    } else {
    }
    return
  }
  func.func @transform_0(%arg0: i32, %arg1: memref<3xi32, #tpu.memory_space<smem>>, %arg2: memref<3xi32, #tpu.memory_space<smem>>, %arg3: memref<3xi32, #tpu.memory_space<smem>>, %arg4: memref<3xi32, #tpu.memory_space<smem>>) -> (i32, i32) {
    %c0_i32 = arith.constant 0 : i32
    %c0_i32_0 = arith.constant 0 : i32
    return %arg0, %c0_i32 : i32, i32
  }
  func.func @transform_1(%arg0: i32, %arg1: memref<3xi32, #tpu.memory_space<smem>>, %arg2: memref<3xi32, #tpu.memory_space<smem>>, %arg3: memref<3xi32, #tpu.memory_space<smem>>, %arg4: memref<3xi32, #tpu.memory_space<smem>>) -> (i32, i32) {
    %c0_i32 = arith.constant 0 : i32
    %c0_i32_0 = arith.constant 0 : i32
    return %arg0, %c0_i32 : i32, i32
  }
  func.func @transform_2(%arg0: i32, %arg1: memref<3xi32, #tpu.memory_space<smem>>, %arg2: memref<3xi32, #tpu.memory_space<smem>>, %arg3: memref<3xi32, #tpu.memory_space<smem>>, %arg4: memref<3xi32, #tpu.memory_space<smem>>) -> (i32, i32, i32) {
    %c0_i32 = arith.constant 0 : i32
    %c0_i32_0 = arith.constant 0 : i32
    %c0_i32_1 = arith.constant 0 : i32
    return %arg0, %c0_i32, %c0_i32_0 : i32, i32, i32
  }
  func.func @transform_3(%arg0: i32, %arg1: memref<3xi32, #tpu.memory_space<smem>>, %arg2: memref<3xi32, #tpu.memory_space<smem>>, %arg3: memref<3xi32, #tpu.memory_space<smem>>, %arg4: memref<3xi32, #tpu.memory_space<smem>>) -> (i32, i32, i32) {
    %0 = arith.index_cast %arg0 : i32 to index
    %1 = memref.load %arg2[%0] : memref<3xi32, #tpu.memory_space<smem>>
    %c0_i32 = arith.constant 0 : i32
    %c0_i32_0 = arith.constant 0 : i32
    %c0_i32_1 = arith.constant 0 : i32
    return %1, %c0_i32, %c0_i32_0 : i32, i32, i32
  }
  func.func @transform_4(%arg0: i32, %arg1: memref<3xi32, #tpu.memory_space<smem>>, %arg2: memref<3xi32, #tpu.memory_space<smem>>, %arg3: memref<3xi32, #tpu.memory_space<smem>>, %arg4: memref<3xi32, #tpu.memory_space<smem>>) -> (i32, i32) {
    %0 = arith.index_cast %arg0 : i32 to index
    %1 = memref.load %arg1[%0] : memref<3xi32, #tpu.memory_space<smem>>
    %c0_i32 = arith.constant 0 : i32
    %c0_i32_0 = arith.constant 0 : i32
    return %1, %c0_i32 : i32, i32
  }
  func.func @transform_5(%arg0: i32, %arg1: memref<3xi32, #tpu.memory_space<smem>>, %arg2: memref<3xi32, #tpu.memory_space<smem>>, %arg3: memref<3xi32, #tpu.memory_space<smem>>, %arg4: memref<3xi32, #tpu.memory_space<smem>>) -> (i32, i32) {
    %c0_i32 = arith.constant 0 : i32
    %c0_i32_0 = arith.constant 0 : i32
    %c0_i32_1 = arith.constant 0 : i32
    return %c0_i32, %c0_i32_0 : i32, i32
  }
  func.func @transform_6(%arg0: i32, %arg1: memref<3xi32, #tpu.memory_space<smem>>, %arg2: memref<3xi32, #tpu.memory_space<smem>>, %arg3: memref<3xi32, #tpu.memory_space<smem>>, %arg4: memref<3xi32, #tpu.memory_space<smem>>) -> (i32, i32) {
    %c0_i32 = arith.constant 0 : i32
    %c0_i32_0 = arith.constant 0 : i32
    %c0_i32_1 = arith.constant 0 : i32
    return %c0_i32, %c0_i32_0 : i32, i32
  }
  func.func @transform_7(%arg0: i32, %arg1: memref<3xi32, #tpu.memory_space<smem>>, %arg2: memref<3xi32, #tpu.memory_space<smem>>, %arg3: memref<3xi32, #tpu.memory_space<smem>>, %arg4: memref<3xi32, #tpu.memory_space<smem>>) -> (i32, i32) {
    %0 = arith.index_cast %arg0 : i32 to index
    %1 = memref.load %arg1[%0] : memref<3xi32, #tpu.memory_space<smem>>
    %c0_i32 = arith.constant 0 : i32
    %c0_i32_0 = arith.constant 0 : i32
    return %1, %c0_i32 : i32, i32
  }
}

</mosaic_0001>

<llo_original>
// kernel: tpu_custom_call.1
$region0: #{tpu_custom_call.1}
  #allocation0 [shape = 'u32[]', space=smem, size = 0x4, offset = 0x4, fixed_abs, tag = 'smem constant byte address 0x4 - core index']
  #allocation1 [shape = 'u32[144,128]{1,0:T(1,128)}', space=vmem, size = 0x12000, scoped, tag = 'internal scratch']
  #allocation2 [shape = 's32[1]{0}', space=sflag, size = 0x4, scoped, tag = 'scoped memory for tpu_custom_call.1']
  #allocation3 [shape = 'u8[512]{0}', space=smem, size = 0x200, scoped, tag = 'prefetched SMEM operand 0']
  #allocation4 [shape = 'u8[512]{0}', space=smem, size = 0x200, scoped, tag = 'prefetched SMEM operand 1']
  #allocation5 [shape = 'u8[512]{0}', space=smem, size = 0x200, scoped, tag = 'prefetched SMEM operand 2']
  #allocation6 [shape = 'u8[512]{0}', space=smem, size = 0x200, scoped, tag = 'prefetched SMEM operand 3']
  %s0 = inlined_call_operand.hbm [shape: s32[3], index: 0, kind: input, shape index: {}]
  %s1 = inlined_call_operand.vmem [shape: s32[3], index: 1, kind: input, shape index: {}]
  %s2 = inlined_call_operand.vmem [shape: s32[3], index: 2, kind: input, shape index: {}]
  %s3 = inlined_call_operand.vmem [shape: s32[3], index: 3, kind: input, shape index: {}]
  %s4 = inlined_call_operand.hbm [shape: bf16[3072,128], index: 4, kind: input, shape index: {}]
  %s5 = inlined_call_operand.hbm [shape: bf16[3072,128], index: 5, kind: input, shape index: {}]
  %s6 = inlined_call_operand.hbm [shape: s32[3,1,1024], index: 6, kind: input, shape index: {}]
  %s7 = inlined_call_operand.hbm [shape: bf16[2,128,128], index: 7, kind: input, shape index: {}]
  %s8 = inlined_call_operand.hbm [shape: f32[32,128], index: 8, kind: input, shape index: {}]
  %s9 = inlined_call_operand.vmem [shape: f32[1,128], index: 9, kind: input, shape index: {}]
  %s10 = inlined_call_operand.vmem [shape: f32[1,128], index: 10, kind: input, shape index: {}]
  %s11 = inlined_call_operand.hbm [shape: f32[32,128], index: 11, kind: output, shape index: {}]
  %s12 = sld [smem:[#allocation0]]
  $region89: #{tpu_custom_call.1} parent=0
    _
  %s14 = ssub.s32 1, %s12
  %s15 = scalar_select 0, %s14, %s12
  %17 = dma.hbm_to_smem %s0, 16, [#allocation3], [#allocation2]
  %s18 = sshll.u32 %s1, 4
  %s19 = int_to_ptr.vmem [resolvable:$true] %s18
  %21 = dma.vmem_to_smem %s19, 16, [#allocation4], [#allocation2]
  %s22 = sshll.u32 %s2, 4
  %s23 = int_to_ptr.vmem [resolvable:$true] %s22
  %25 = dma.vmem_to_smem %s23, 16, [#allocation5], [#allocation2]
  %s26 = sshll.u32 %s3, 4
  %s27 = int_to_ptr.vmem [resolvable:$true] %s26
  %29 = dma.vmem_to_smem %s27, 16, [#allocation6], [#allocation2]
  %30 = dma.done [#allocation2], 64
  %31 = sfence
  $region1: #{tpu_custom_call.1} parent=0
    #allocation7 [shape = 'u8[524288]{0}', space=vmem, size = 0x80000, scoped, tag = 'input window, operand 4']
    #allocation8 [shape = 's32[2]{0}', space=sflag, size = 0x8, scoped, tag = 'scoped memory for tpu_custom_call.1']
    #allocation9 [shape = 's32[2]{0}', space=sflag, size = 0x8, scoped, tag = 'scoped memory for tpu_custom_call.1']
    #allocation10 [shape = 'u8[524288]{0}', space=vmem, size = 0x80000, scoped, tag = 'input window, operand 5']
    #allocation11 [shape = 's32[2]{0}', space=sflag, size = 0x8, scoped, tag = 'scoped memory for tpu_custom_call.1']
    #allocation12 [shape = 'u8[8192]{0}', space=vmem, size = 0x2000, scoped, tag = 'input window, operand 6']
    #allocation13 [shape = 'u8[65536]{0}', space=vmem, size = 0x10000, scoped, tag = 'input window, operand 7']
    #allocation14 [shape = 's32[2]{0}', space=sflag, size = 0x8, scoped, tag = 'scoped memory for tpu_custom_call.1']
    #allocation15 [shape = 'u8[32768]{0}', space=vmem, size = 0x8000, scoped, tag = 'input window, operand 8']
    #allocation16 [shape = 'u8[32768]{0}', space=vmem, size = 0x8000, scoped, tag = 'output window, operand 0']
    %32 = vsyncpa [#allocation8], 0
    %s33 = scalar_lea.sflag [#allocation8], 1
    %34 = vsyncpa %s33, 0
    %35 = vsyncpa [#allocation11], 0
    %s36 = scalar_lea.sflag [#allocation11], 1
    %37 = vsyncpa %s36, 0
    %38 = vsyncpa [#allocation14], 0
    %s39 = scalar_lea.sflag [#allocation14], 1
    %40 = vsyncpa %s39, 0
    %41 = vsyncpa [#allocation9], 0
    %s42 = scalar_lea.sflag [#allocation9], 1
    %43 = vsyncpa %s42, 0
    loop: start=0, step=1, limit=5
    $region2: #{tpu_custom_call.1} parent=1 // loop_pre_header
      _
    $region3: #{tpu_custom_call.1} parent=1 // loop_header
      %s45 = sphi 0, %s49
      %p46 = scmp.ge.s32.totalorder %s45, 5
      %s55 = sphi 0, %s57
      %s58 = sphi 0, %s55
      %s59 = sphi 0, %s58
      %s75 = sphi 0, %s59
      %s81 = sphi 0, %s83
      %s84 = sphi 0, %s81
      %s85 = sphi 0, %s84
      %s101 = sphi 0, %s85
      %s107 = sphi 0, %s109
      %s110 = sphi 0, %s107
      %s111 = sphi 0, %s110
      %s127 = sphi 0, %s111
      %s135 = sphi 0, %s137
      %s138 = sphi 0, %s135
      %s139 = sphi 0, %s138
      %s155 = sphi 0, %s139
      %s163 = sphi 0, %s165
      %s166 = sphi 0, %s163
      %s167 = sphi 0, %s166
      %s183 = sphi 0, %s167
      %s187 = sphi 0, %s187
      %s189 = sphi 0, %s187
      %s190 = sphi 0, %s189
      %s204 = sphi 0, %s190
      %s208 = sphi 0, %s208
      %s210 = sphi 0, %s208
      %s211 = sphi 0, %s210
      %s225 = sphi 0, %s211
      %s233 = sphi 0, %s235
      %s236 = sphi 0, %s233
      %s237 = sphi 0, %s236
      %s253 = sphi 0, %s237
    $region4: #{tpu_custom_call.1} parent=1 // loop_header_branch
      %48 = sbr.rel (%p46) target = $region8
    $region5: #{tpu_custom_call.1} parent=1 // loop_body
      %s50 = ssub.s32 %s45, 1
      %s51 = ssub.s32 %s45, 2
      %s52 = sadd.s32 %s45, 1
      %s53 = ssub.s32 %s45, %s52
      %p54 = scmp.eq.s32.totalorder %s53, 0
      %s56 = sadd.s32 %s55, 1
      %s57 = scalar_select %p54, %s55, %s56
      %p60 = pneg %p54
      %p61 = scmp.eq.s32.totalorder %s45, 2
      %p62 = por %p60, %p61
      %p63 = scmp.ne.s32.totalorder %s55, %s58
      %p64 = scmp.eq.s32.totalorder %s45, 0
      %p65 = por %p63, %p64
      %p66 = scmp.ne.s32.totalorder %s55, %s58
      %p67 = scmp.eq.s32.totalorder %s50, 2
      %p68 = por %p66, %p67
      %p69 = scmp.ne.s32.totalorder %s58, %s59
      %p70 = scmp.eq.s32.totalorder %s50, 0
      %p71 = por %p69, %p70
      %p72 = scmp.ne.s32.totalorder %s58, %s59
      %p73 = scmp.eq.s32.totalorder %s51, 2
      %p74 = por %p72, %p73
      %p76 = scmp.ne.s32.totalorder %s59, %s75
      %p77 = scmp.eq.s32.totalorder %s51, 0
      %p78 = por %p76, %p77
      %s79 = ssub.s32 %s45, %s52
      %p80 = scmp.eq.s32.totalorder %s79, 0
      %s82 = sadd.s32 %s81, 1
      %s83 = scalar_select %p80, %s81, %s82
      %p86 = pneg %p80
      %p87 = scmp.eq.s32.totalorder %s45, 2
      %p88 = por %p86, %p87
      %p89 = scmp.ne.s32.totalorder %s81, %s84
      %p90 = scmp.eq.s32.totalorder %s45, 0
      %p91 = por %p89, %p90
      %p92 = scmp.ne.s32.totalorder %s81, %s84
      %p93 = scmp.eq.s32.totalorder %s50, 2
      %p94 = por %p92, %p93
      %p95 = scmp.ne.s32.totalorder %s84, %s85
      %p96 = scmp.eq.s32.totalorder %s50, 0
      %p97 = por %p95, %p96
      %p98 = scmp.ne.s32.totalorder %s84, %s85
      %p99 = scmp.eq.s32.totalorder %s51, 2
      %p100 = por %p98, %p99
      %p102 = scmp.ne.s32.totalorder %s85, %s101
      %p103 = scmp.eq.s32.totalorder %s51, 0
      %p104 = por %p102, %p103
      %s105 = ssub.s32 %s45, %s52
      %p106 = scmp.eq.s32.totalorder %s105, 0
      %s108 = sadd.s32 %s107, 1
      %s109 = scalar_select %p106, %s107, %s108
      %p112 = pneg %p106
      %p113 = scmp.eq.s32.totalorder %s45, 2
      %p114 = por %p112, %p113
      %p115 = scmp.ne.s32.totalorder %s107, %s110
      %p116 = scmp.eq.s32.totalorder %s45, 0
      %p117 = por %p115, %p116
      %p118 = scmp.ne.s32.totalorder %s107, %s110
      %p119 = scmp.eq.s32.totalorder %s50, 2
      %p120 = por %p118, %p119
      %p121 = scmp.ne.s32.totalorder %s110, %s111
      %p122 = scmp.eq.s32.totalorder %s50, 0
      %p123 = por %p121, %p122
      %p124 = scmp.ne.s32.totalorder %s110, %s111
      %p125 = scmp.eq.s32.totalorder %s51, 2
      %p126 = por %p124, %p125
      %p128 = scmp.ne.s32.totalorder %s111, %s127
      %p129 = scmp.eq.s32.totalorder %s51, 0
      %p130 = por %p128, %p129
      %s131 = sld [smem:[#allocation4 + %s45]]
      %s132 = sld [smem:[#allocation4 + %s52]]
      %s133 = ssub.s32 %s131, %s132
      %p134 = scmp.eq.s32.totalorder %s133, 0
      %s136 = sadd.s32 %s135, 1
      %s137 = scalar_select %p134, %s135, %s136
      %p140 = pneg %p134
      %p141 = scmp.eq.s32.totalorder %s45, 2
      %p142 = por %p140, %p141
      %p143 = scmp.ne.s32.totalorder %s135, %s138
      %p144 = scmp.eq.s32.totalorder %s45, 0
      %p145 = por %p143, %p144
      %p146 = scmp.ne.s32.totalorder %s135, %s138
      %p147 = scmp.eq.s32.totalorder %s50, 2
      %p148 = por %p146, %p147
      %p149 = scmp.ne.s32.totalorder %s138, %s139
      %p150 = scmp.eq.s32.totalorder %s50, 0
      %p151 = por %p149, %p150
      %p152 = scmp.ne.s32.totalorder %s138, %s139
      %p153 = scmp.eq.s32.totalorder %s51, 2
      %p154 = por %p152, %p153
      %p156 = scmp.ne.s32.totalorder %s139, %s155
      %p157 = scmp.eq.s32.totalorder %s51, 0
      %p158 = por %p156, %p157
      %s159 = sld [smem:[#allocation3 + %s45]]
      %s160 = sld [smem:[#allocation3 + %s52]]
      %s161 = ssub.s32 %s159, %s160
      %p162 = scmp.eq.s32.totalorder %s161, 0
      %s164 = sadd.s32 %s163, 1
      %s165 = scalar_select %p162, %s163, %s164
      %p168 = pneg %p162
      %p169 = scmp.eq.s32.totalorder %s45, 2
      %p170 = por %p168, %p169
      %p171 = scmp.ne.s32.totalorder %s163, %s166
      %p172 = scmp.eq.s32.totalorder %s45, 0
      %p173 = por %p171, %p172
      %p174 = scmp.ne.s32.totalorder %s163, %s166
      %p175 = scmp.eq.s32.totalorder %s50, 2
      %p176 = por %p174, %p175
      %p177 = scmp.ne.s32.totalorder %s166, %s167
      %p178 = scmp.eq.s32.totalorder %s50, 0
      %p179 = por %p177, %p178
      %p180 = scmp.ne.s32.totalorder %s166, %s167
      %p181 = scmp.eq.s32.totalorder %s51, 2
      %p182 = por %p180, %p181
      %p184 = scmp.ne.s32.totalorder %s167, %s183
      %p185 = scmp.eq.s32.totalorder %s51, 0
      %p186 = por %p184, %p185
      %s188 = sadd.s32 %s187, 1
      %p191 = scmp.eq.s32.totalorder %s45, 2
      %p192 = scmp.ne.s32.totalorder %s187, %s189
      %p193 = scmp.eq.s32.totalorder %s45, 0
      %p194 = por %p192, %p193
      %p195 = scmp.ne.s32.totalorder %s187, %s189
      %p196 = scmp.eq.s32.totalorder %s50, 2
      %p197 = por %p195, %p196
      %p198 = scmp.ne.s32.totalorder %s189, %s190
      %p199 = scmp.eq.s32.totalorder %s50, 0
      %p200 = por %p198, %p199
      %p201 = scmp.ne.s32.totalorder %s189, %s190
      %p202 = scmp.eq.s32.totalorder %s51, 2
      %p203 = por %p201, %p202
      %p205 = scmp.ne.s32.totalorder %s190, %s204
      %p206 = scmp.eq.s32.totalorder %s51, 0
      %p207 = por %p205, %p206
      %s209 = sadd.s32 %s208, 1
      %p212 = scmp.eq.s32.totalorder %s45, 2
      %p213 = scmp.ne.s32.totalorder %s208, %s210
      %p214 = scmp.eq.s32.totalorder %s45, 0
      %p215 = por %p213, %p214
      %p216 = scmp.ne.s32.totalorder %s208, %s210
      %p217 = scmp.eq.s32.totalorder %s50, 2
      %p218 = por %p216, %p217
      %p219 = scmp.ne.s32.totalorder %s210, %s211
      %p220 = scmp.eq.s32.totalorder %s50, 0
      %p221 = por %p219, %p220
      %p222 = scmp.ne.s32.totalorder %s210, %s211
      %p223 = scmp.eq.s32.totalorder %s51, 2
      %p224 = por %p222, %p223
      %p226 = scmp.ne.s32.totalorder %s211, %s225
      %p227 = scmp.eq.s32.totalorder %s51, 0
      %p228 = por %p226, %p227
      %s229 = sld [smem:[#allocation3 + %s45]]
      %s230 = sld [smem:[#allocation3 + %s52]]
      %s231 = ssub.s32 %s229, %s230
      %p232 = scmp.eq.s32.totalorder %s231, 0
      %s234 = sadd.s32 %s233, 1
      %s235 = scalar_select %p232, %s233, %s234
      %p238 = pneg %p232
      %p239 = scmp.eq.s32.totalorder %s45, 2
      %p240 = por %p238, %p239
      %p241 = scmp.ne.s32.totalorder %s233, %s236
      %p242 = scmp.eq.s32.totalorder %s45, 0
      %p243 = por %p241, %p242
      %p244 = scmp.ne.s32.totalorder %s233, %s236
      %p245 = scmp.eq.s32.totalorder %s50, 2
      %p246 = por %p244, %p245
      %p247 = scmp.ne.s32.totalorder %s236, %s237
      %p248 = scmp.eq.s32.totalorder %s50, 0
      %p249 = por %p247, %p248
      %p250 = scmp.ne.s32.totalorder %s236, %s237
      %p251 = scmp.eq.s32.totalorder %s51, 2
      %p252 = por %p250, %p251
      %p254 = scmp.ne.s32.totalorder %s237, %s253
      %p255 = scmp.eq.s32.totalorder %s51, 0
      %p256 = por %p254, %p255
      %p257 = scmp.le.s32.totalorder 1, %s45
      %p258 = scmp.lt.s32.totalorder %s45, 4
      %p259 = pnand %p257, %p258
      %p260 = pneg %p259
      // Predicated region
      $region9: #{tpu_custom_call.1} parent=5 // pred_check
        _
      $region10: #{tpu_custom_call.1} parent=5 // pred_check_branch
        %262 = sbr.rel (%p259) target = $region12
      $region11: #{tpu_custom_call.1} parent=5 // pred_region
        %s263 = ssub.s32 %s45, 1
        // Predicated region
        $region13: #{tpu_custom_call.1} parent=11 // pred_check
          %p264 = pneg %p200
        $region14: #{tpu_custom_call.1} parent=11 // pred_check_branch
          %266 = sbr.rel (%p264) target = $region16
        $region15: #{tpu_custom_call.1} parent=11 // pred_region
          _
        $region16: #{tpu_custom_call.1} parent=11 // pred_fallthru
          _
        // Predicated region
        $region17: #{tpu_custom_call.1} parent=11 // pred_check
          %p267 = pneg %p221
        $region18: #{tpu_custom_call.1} parent=11 // pred_check_branch
          %269 = sbr.rel (%p267) target = $region20
        $region19: #{tpu_custom_call.1} parent=11 // pred_region
          _
        $region20: #{tpu_custom_call.1} parent=11 // pred_fallthru
          _
      $region12: #{tpu_custom_call.1} parent=5 // pred_fallthru
        _
      %p270 = scmp.lt.s32.totalorder %s45, 3
      // Predicated region
      $region21: #{tpu_custom_call.1} parent=5 // pred_check
        %p271 = pneg %p270
      $region22: #{tpu_custom_call.1} parent=5 // pred_check_branch
        %273 = sbr.rel (%p271) target = $region24
      $region23: #{tpu_custom_call.1} parent=5 // pred_region
        // Predicated region
        $region25: #{tpu_custom_call.1} parent=23 // pred_check
          %p274 = pneg %p65
        $region26: #{tpu_custom_call.1} parent=23 // pred_check_branch
          %276 = sbr.rel (%p274) target = $region28
        $region27: #{tpu_custom_call.1} parent=23 // pred_region
          %s277 = sand.u32 %s55, 1
          %s278 = scalar_lea.sflag [#allocation8], %s277
          %s279 = sand.u32 %s55, 1
          %s280 = smul.addr %s279, 512
          %s281 = scalar_lea.vmem [#allocation7], %s280
          %s282 = smul.u32 128, %s45
          %s284 = ssub.s32 8192, 8192
          %285 = vsyncadd %s278, %s284
          %s286 = smul.addr %s282, 64
          %s287 = scalar_lea.hbm %s4, %s286
          %s288 = sshll.u32 %s281, 4
          %s289 = int_to_ptr.vmem [resolvable:$true] %s288
          %294 = dma.hbm_to_vmem [thread:$0]  %s287, 8192, %s289, %s278, 64, 64, 4
        $region28: #{tpu_custom_call.1} parent=23 // pred_fallthru
          _
        // Predicated region
        $region29: #{tpu_custom_call.1} parent=23 // pred_check
          %p295 = pneg %p91
        $region30: #{tpu_custom_call.1} parent=23 // pred_check_branch
          %297 = sbr.rel (%p295) target = $region32
        $region31: #{tpu_custom_call.1} parent=23 // pred_region
          %s298 = sand.u32 %s45, 1
          %s299 = scalar_lea.sflag [#allocation11], %s298
          %s300 = sand.u32 %s81, 1
          %s301 = smul.addr %s300, 512
          %s302 = scalar_lea.vmem [#allocation10], %s301
          %s303 = smul.u32 128, %s45
          %s305 = ssub.s32 8192, 8192
          %306 = vsyncadd %s299, %s305
          %s307 = smul.addr %s303, 64
          %s308 = scalar_lea.hbm %s5, %s307
          %s309 = sshll.u32 %s302, 4
          %s310 = int_to_ptr.vmem [resolvable:$true] %s309
          %315 = dma.hbm_to_vmem [thread:$0]  %s308, 8192, %s310, %s299, 64, 64, 4
        $region32: #{tpu_custom_call.1} parent=23 // pred_fallthru
          _
        // Predicated region
        $region33: #{tpu_custom_call.1} parent=23 // pred_check
          %p316 = pneg %p117
        $region34: #{tpu_custom_call.1} parent=23 // pred_check_branch
          %318 = sbr.rel (%p316) target = $region36
        $region35: #{tpu_custom_call.1} parent=23 // pred_region
          %s319 = sand.u32 %s45, 1
          %s320 = scalar_lea.sflag [#allocation11], %s319
          %s321 = sand.u32 %s107, 1
          %s322 = smul.addr %s321, 8
          %s323 = scalar_lea.vmem [#allocation12], %s322
          %s325 = ssub.s32 128, 128
          %326 = vsyncadd %s320, %s325
          %s327 = smul.addr %s45, 8
          %s328 = smul.addr %s327, 16
          %s329 = scalar_lea.hbm %s6, %s328
          %s331 = sshll.u32 %s323, 4
          %s332 = int_to_ptr.vmem [resolvable:$true] %s331
          %334 = dma.hbm_to_vmem [thread:$0]  %s329, 128, %s332, %s320
        $region36: #{tpu_custom_call.1} parent=23 // pred_fallthru
          _
        // Predicated region
        $region37: #{tpu_custom_call.1} parent=23 // pred_check
          %p335 = pneg %p145
        $region38: #{tpu_custom_call.1} parent=23 // pred_check_branch
          %337 = sbr.rel (%p335) target = $region40
        $region39: #{tpu_custom_call.1} parent=23 // pred_region
          %s338 = sand.u32 %s45, 1
          %s339 = scalar_lea.sflag [#allocation14], %s338
          %s340 = sand.u32 %s135, 1
          %s341 = smul.addr %s340, 64
          %s342 = scalar_lea.vmem [#allocation13], %s341
          %s343 = sld [smem:[#allocation4 + %s45]]
          %s345 = ssub.s32 1024, 1024
          %346 = vsyncadd %s339, %s345
          %s347 = smul.addr %s343, 16
          %s348 = smul.addr %s347, 64
          %s349 = scalar_lea.hbm %s7, %s348
          %s350 = sshll.u32 %s342, 4
          %s351 = int_to_ptr.vmem [resolvable:$true] %s350
          %356 = dma.hbm_to_vmem [thread:$0]  %s349, 1024, %s351, %s339, 64, 64, 4
        $region40: #{tpu_custom_call.1} parent=23 // pred_fallthru
          _
        // Predicated region
        $region41: #{tpu_custom_call.1} parent=23 // pred_check
          %p357 = pneg %p173
        $region42: #{tpu_custom_call.1} parent=23 // pred_check_branch
          %359 = sbr.rel (%p357) target = $region44
        $region43: #{tpu_custom_call.1} parent=23 // pred_region
          %s360 = sand.u32 %s45, 1
          %s361 = scalar_lea.sflag [#allocation14], %s360
          %s362 = sand.u32 %s163, 1
          %s363 = smul.addr %s362, 32
          %s364 = scalar_lea.vmem [#allocation15], %s363
          %s365 = sld [smem:[#allocation3 + %s45]]
          %s366 = smul.u32 4, %s365
          %s368 = ssub.s32 512, 512
          %369 = vsyncadd %s361, %s368
          %s370 = smul.addr %s366, 128
          %s371 = scalar_lea.hbm %s8, %s370
          %s372 = sshll.u32 %s364, 4
          %s373 = int_to_ptr.vmem [resolvable:$true] %s372
          %378 = dma.hbm_to_vmem [thread:$0]  %s371, 512, %s373, %s361, 128, 128, 8
        $region44: #{tpu_custom_call.1} parent=23 // pred_fallthru
          _
      $region24: #{tpu_custom_call.1} parent=5 // pred_fallthru
        _
      %p379 = scmp.le.s32.totalorder 1, %s45
      %p380 = scmp.lt.s32.totalorder %s45, 4
      %p381 = pnand %p379, %p380
      %p382 = pneg %p381
      // Predicated region
      $region45: #{tpu_custom_call.1} parent=5 // pred_check
        _
      $region46: #{tpu_custom_call.1} parent=5 // pred_check_branch
        %384 = sbr.rel (%p381) target = $region48
      $region47: #{tpu_custom_call.1} parent=5 // pred_region
        %s385 = ssub.s32 %s45, 1
        %s386 = sand.u32 %s58, 1
        %s387 = scalar_lea.sflag [#allocation8], %s386
        %s388 = sand.u32 %s58, 1
        %s389 = smul.addr %s388, 512
        %s390 = scalar_lea.vmem [#allocation7], %s389
        // Predicated region
        $region49: #{tpu_custom_call.1} parent=47 // pred_check
          %p391 = pneg %p71
        $region50: #{tpu_custom_call.1} parent=47 // pred_check_branch
          %393 = sbr.rel (%p391) target = $region52
        $region51: #{tpu_custom_call.1} parent=47 // pred_region
          %394 = dma.done %s387, 8192
        $region52: #{tpu_custom_call.1} parent=47 // pred_fallthru
          _
        %s395 = sand.u32 %s50, 1
        %s396 = scalar_lea.sflag [#allocation11], %s395
        %s397 = sand.u32 %s84, 1
        %s398 = smul.addr %s397, 512
        %s399 = scalar_lea.vmem [#allocation10], %s398
        // Predicated region
        $region53: #{tpu_custom_call.1} parent=47 // pred_check
          %p400 = pneg %p97
        $region54: #{tpu_custom_call.1} parent=47 // pred_check_branch
          %402 = sbr.rel (%p400) target = $region56
        $region55: #{tpu_custom_call.1} parent=47 // pred_region
          %403 = dma.done %s396, 8192
        $region56: #{tpu_custom_call.1} parent=47 // pred_fallthru
          _
        %s404 = sand.u32 %s50, 1
        %s405 = scalar_lea.sflag [#allocation11], %s404
        %s406 = sand.u32 %s110, 1
        %s407 = smul.addr %s406, 8
        %s408 = scalar_lea.vmem [#allocation12], %s407
        // Predicated region
        $region57: #{tpu_custom_call.1} parent=47 // pred_check
          %p409 = pneg %p123
        $region58: #{tpu_custom_call.1} parent=47 // pred_check_branch
          %411 = sbr.rel (%p409) target = $region60
        $region59: #{tpu_custom_call.1} parent=47 // pred_region
          %412 = dma.done %s405, 128
        $region60: #{tpu_custom_call.1} parent=47 // pred_fallthru
          _
        %s413 = sand.u32 %s50, 1
        %s414 = scalar_lea.sflag [#allocation14], %s413
        %s415 = sand.u32 %s138, 1
        %s416 = smul.addr %s415, 64
        %s417 = scalar_lea.vmem [#allocation13], %s416
        // Predicated region
        $region61: #{tpu_custom_call.1} parent=47 // pred_check
          %p418 = pneg %p151
        $region62: #{tpu_custom_call.1} parent=47 // pred_check_branch
          %420 = sbr.rel (%p418) target = $region64
        $region63: #{tpu_custom_call.1} parent=47 // pred_region
          %421 = dma.done %s414, 1024
        $region64: #{tpu_custom_call.1} parent=47 // pred_fallthru
          _
        %s422 = sand.u32 %s50, 1
        %s423 = scalar_lea.sflag [#allocation14], %s422
        %s424 = sand.u32 %s166, 1
        %s425 = smul.addr %s424, 32
        %s426 = scalar_lea.vmem [#allocation15], %s425
        // Predicated region
        $region65: #{tpu_custom_call.1} parent=47 // pred_check
          %p427 = pneg %p179
        $region66: #{tpu_custom_call.1} parent=47 // pred_check_branch
          %429 = sbr.rel (%p427) target = $region68
        $region67: #{tpu_custom_call.1} parent=47 // pred_region
          %430 = dma.done %s423, 512
        $region68: #{tpu_custom_call.1} parent=47 // pred_fallthru
          _
        %s431 = sand.u32 %s58, 1
        %s432 = scalar_lea.sflag [#allocation8], %s431
        %s433 = sand.u32 %s58, 1
        %s434 = smul.addr %s433, 512
        %s435 = scalar_lea.vmem [#allocation7], %s434
        %p436 = pneg %p71
        %p437 = pneg %p68
        %s438 = sand.u32 %s50, 1
        %s439 = scalar_lea.sflag [#allocation11], %s438
        %s440 = sand.u32 %s84, 1
        %s441 = smul.addr %s440, 512
        %s442 = scalar_lea.vmem [#allocation10], %s441
        %p443 = pneg %p97
        %p444 = pneg %p94
        %s445 = sand.u32 %s50, 1
        %s446 = scalar_lea.sflag [#allocation11], %s445
        %s447 = sand.u32 %s110, 1
        %s448 = smul.addr %s447, 8
        %s449 = scalar_lea.vmem [#allocation12], %s448
        %p450 = pneg %p123
        %p451 = pneg %p120
        %s452 = sand.u32 %s50, 1
        %s453 = scalar_lea.sflag [#allocation14], %s452
        %s454 = sand.u32 %s138, 1
        %s455 = smul.addr %s454, 64
        %s456 = scalar_lea.vmem [#allocation13], %s455
        %p457 = pneg %p151
        %p458 = pneg %p148
        %s459 = sand.u32 %s50, 1
        %s460 = scalar_lea.sflag [#allocation14], %s459
        %s461 = sand.u32 %s166, 1
        %s462 = smul.addr %s461, 32
        %s463 = scalar_lea.vmem [#allocation15], %s462
        %p464 = pneg %p179
        %p465 = pneg %p176
        %p466 = pneg %p200
        %p467 = pneg %p197
        %p468 = pneg %p221
        %p469 = pneg %p218
        %p470 = pneg %p249
        %p471 = pneg %p246
        %s472 = sand.u32 %s236, 1
        %s473 = scalar_lea.sflag [#allocation9], %s472
        %s474 = sand.u32 %s236, 1
        %s475 = smul.addr %s474, 32
        %s476 = scalar_lea.vmem [#allocation16], %s475
        %s477 = smul.u32 128, %s50
        %s478 = smul.u32 128, %s50
        %s479 = sld [smem:[#allocation4 + %s50]]
        %s480 = sld [smem:[#allocation3 + %s50]]
        %s481 = smul.u32 4, %s480
        %s482 = sld [smem:[#allocation3 + %s50]]
        %s483 = smul.u32 4, %s482
        %s485 = sld [smem:[#allocation5 + %s50]]
        %p486 = scmp.eq.s32.totalorder %s485, 1
        // Predicated region
        $region69: #{tpu_custom_call.1} parent=47 // pred_check
          %p487 = pneg %p486
        $region70: #{tpu_custom_call.1} parent=47 // pred_check_branch
          %489 = sbr.rel (%p487) target = $region72
        $region71: #{tpu_custom_call.1} parent=47 // pred_region
          %v490 = vld [vmem:[%s426] sm:$0xff]
          %v491 = vld [vmem:[%s426 + $0x8] sm:$0xff]
          %v492 = vld [vmem:[%s426 + $0x10] sm:$0xff]
          %v493 = vld [vmem:[%s426 + $0x18] sm:$0xff]
          %494 = vst [vmem:[%s476] sm:$0xff] %v490
          %495 = vst [vmem:[%s476 + $0x8] sm:$0xff] %v491
          %496 = vst [vmem:[%s476 + $0x10] sm:$0xff] %v492
          %497 = vst [vmem:[%s476 + $0x18] sm:$0xff] %v493
        $region72: #{tpu_custom_call.1} parent=47 // pred_fallthru
          _
        %v498 = vld [vmem:[%s390] sm:$0xf]
        %v499 = vld [vmem:[%s390 + $0x4] sm:$0xf]
        %v500 = vld [vmem:[%s390 + $0x8] sm:$0xf]
        %v501 = vld [vmem:[%s390 + $0xc] sm:$0xf]
        %v502 = vld [vmem:[%s390 + $0x10] sm:$0xf]
        %v503 = vld [vmem:[%s390 + $0x14] sm:$0xf]
        %v504 = vld [vmem:[%s390 + $0x18] sm:$0xf]
        %v505 = vld [vmem:[%s390 + $0x1c] sm:$0xf]
        %v506 = vld [vmem:[%s390 + $0x20] sm:$0xf]
        %v507 = vld [vmem:[%s390 + $0x24] sm:$0xf]
        %v508 = vld [vmem:[%s390 + $0x28] sm:$0xf]
        %v509 = vld [vmem:[%s390 + $0x2c] sm:$0xf]
        %v510 = vld [vmem:[%s390 + $0x30] sm:$0xf]
        %v511 = vld [vmem:[%s390 + $0x34] sm:$0xf]
        %v512 = vld [vmem:[%s390 + $0x38] sm:$0xf]
        %v513 = vld [vmem:[%s390 + $0x3c] sm:$0xf]
        %v514 = vld [vmem:[%s390 + $0x40] sm:$0xf]
        %v515 = vld [vmem:[%s390 + $0x44] sm:$0xf]
        %v516 = vld [vmem:[%s390 + $0x48] sm:$0xf]
        %v517 = vld [vmem:[%s390 + $0x4c] sm:$0xf]
        %v518 = vld [vmem:[%s390 + $0x50] sm:$0xf]
        %v519 = vld [vmem:[%s390 + $0x54] sm:$0xf]
        %v520 = vld [vmem:[%s390 + $0x58] sm:$0xf]
        %v521 = vld [vmem:[%s390 + $0x5c] sm:$0xf]
        %v522 = vld [vmem:[%s390 + $0x60] sm:$0xf]
        %v523 = vld [vmem:[%s390 + $0x64] sm:$0xf]
        %v524 = vld [vmem:[%s390 + $0x68] sm:$0xf]
        %v525 = vld [vmem:[%s390 + $0x6c] sm:$0xf]
        %v526 = vld [vmem:[%s390 + $0x70] sm:$0xf]
        %v527 = vld [vmem:[%s390 + $0x74] sm:$0xf]
        %v528 = vld [vmem:[%s390 + $0x78] sm:$0xf]
        %v529 = vld [vmem:[%s390 + $0x7c] sm:$0xf]
        %v530 = vld [vmem:[%s390 + $0x80] sm:$0xf]
        %v531 = vld [vmem:[%s390 + $0x84] sm:$0xf]
        %v532 = vld [vmem:[%s390 + $0x88] sm:$0xf]
        %v533 = vld [vmem:[%s390 + $0x8c] sm:$0xf]
        %v534 = vld [vmem:[%s390 + $0x90] sm:$0xf]
        %v535 = vld [vmem:[%s390 + $0x94] sm:$0xf]
        %v536 = vld [vmem:[%s390 + $0x98] sm:$0xf]
        %v537 = vld [vmem:[%s390 + $0x9c] sm:$0xf]
        %v538 = vld [vmem:[%s390 + $0xa0] sm:$0xf]
        %v539 = vld [vmem:[%s390 + $0xa4] sm:$0xf]
        %v540 = vld [vmem:[%s390 + $0xa8] sm:$0xf]
        %v541 = vld [vmem:[%s390 + $0xac] sm:$0xf]
        %v542 = vld [vmem:[%s390 + $0xb0] sm:$0xf]
        %v543 = vld [vmem:[%s390 + $0xb4] sm:$0xf]
        %v544 = vld [vmem:[%s390 + $0xb8] sm:$0xf]
        %v545 = vld [vmem:[%s390 + $0xbc] sm:$0xf]
        %v546 = vld [vmem:[%s390 + $0xc0] sm:$0xf]
        %v547 = vld [vmem:[%s390 + $0xc4] sm:$0xf]
        %v548 = vld [vmem:[%s390 + $0xc8] sm:$0xf]
        %v549 = vld [vmem:[%s390 + $0xcc] sm:$0xf]
        %v550 = vld [vmem:[%s390 + $0xd0] sm:$0xf]
        %v551 = vld [vmem:[%s390 + $0xd4] sm:$0xf]
        %v552 = vld [vmem:[%s390 + $0xd8] sm:$0xf]
        %v553 = vld [vmem:[%s390 + $0xdc] sm:$0xf]
        %v554 = vld [vmem:[%s390 + $0xe0] sm:$0xf]
        %v555 = vld [vmem:[%s390 + $0xe4] sm:$0xf]
        %v556 = vld [vmem:[%s390 + $0xe8] sm:$0xf]
        %v557 = vld [vmem:[%s390 + $0xec] sm:$0xf]
        %v558 = vld [vmem:[%s390 + $0xf0] sm:$0xf]
        %v559 = vld [vmem:[%s390 + $0xf4] sm:$0xf]
        %v560 = vld [vmem:[%s390 + $0xf8] sm:$0xf]
        %v561 = vld [vmem:[%s390 + $0xfc] sm:$0xf]
        %v562 = vld [vmem:[%s390 + $0x100] sm:$0xf]
        %v563 = vld [vmem:[%s390 + $0x104] sm:$0xf]
        %v564 = vld [vmem:[%s390 + $0x108] sm:$0xf]
        %v565 = vld [vmem:[%s390 + $0x10c] sm:$0xf]
        %v566 = vld [vmem:[%s390 + $0x110] sm:$0xf]
        %v567 = vld [vmem:[%s390 + $0x114] sm:$0xf]
        %v568 = vld [vmem:[%s390 + $0x118] sm:$0xf]
        %v569 = vld [vmem:[%s390 + $0x11c] sm:$0xf]
        %v570 = vld [vmem:[%s390 + $0x120] sm:$0xf]
        %v571 = vld [vmem:[%s390 + $0x124] sm:$0xf]
        %v572 = vld [vmem:[%s390 + $0x128] sm:$0xf]
        %v573 = vld [vmem:[%s390 + $0x12c] sm:$0xf]
        %v574 = vld [vmem:[%s390 + $0x130] sm:$0xf]
        %v575 = vld [vmem:[%s390 + $0x134] sm:$0xf]
        %v576 = vld [vmem:[%s390 + $0x138] sm:$0xf]
        %v577 = vld [vmem:[%s390 + $0x13c] sm:$0xf]
        %v578 = vld [vmem:[%s390 + $0x140] sm:$0xf]
        %v579 = vld [vmem:[%s390 + $0x144] sm:$0xf]
        %v580 = vld [vmem:[%s390 + $0x148] sm:$0xf]
        %v581 = vld [vmem:[%s390 + $0x14c] sm:$0xf]
        %v582 = vld [vmem:[%s390 + $0x150] sm:$0xf]
        %v583 = vld [vmem:[%s390 + $0x154] sm:$0xf]
        %v584 = vld [vmem:[%s390 + $0x158] sm:$0xf]
        %v585 = vld [vmem:[%s390 + $0x15c] sm:$0xf]
        %v586 = vld [vmem:[%s390 + $0x160] sm:$0xf]
        %v587 = vld [vmem:[%s390 + $0x164] sm:$0xf]
        %v588 = vld [vmem:[%s390 + $0x168] sm:$0xf]
        %v589 = vld [vmem:[%s390 + $0x16c] sm:$0xf]
        %v590 = vld [vmem:[%s390 + $0x170] sm:$0xf]
        %v591 = vld [vmem:[%s390 + $0x174] sm:$0xf]
        %v592 = vld [vmem:[%s390 + $0x178] sm:$0xf]
        %v593 = vld [vmem:[%s390 + $0x17c] sm:$0xf]
        %v594 = vld [vmem:[%s390 + $0x180] sm:$0xf]
        %v595 = vld [vmem:[%s390 + $0x184] sm:$0xf]
        %v596 = vld [vmem:[%s390 + $0x188] sm:$0xf]
        %v597 = vld [vmem:[%s390 + $0x18c] sm:$0xf]
        %v598 = vld [vmem:[%s390 + $0x190] sm:$0xf]
        %v599 = vld [vmem:[%s390 + $0x194] sm:$0xf]
        %v600 = vld [vmem:[%s390 + $0x198] sm:$0xf]
        %v601 = vld [vmem:[%s390 + $0x19c] sm:$0xf]
        %v602 = vld [vmem:[%s390 + $0x1a0] sm:$0xf]
        %v603 = vld [vmem:[%s390 + $0x1a4] sm:$0xf]
        %v604 = vld [vmem:[%s390 + $0x1a8] sm:$0xf]
        %v605 = vld [vmem:[%s390 + $0x1ac] sm:$0xf]
        %v606 = vld [vmem:[%s390 + $0x1b0] sm:$0xf]
        %v607 = vld [vmem:[%s390 + $0x1b4] sm:$0xf]
        %v608 = vld [vmem:[%s390 + $0x1b8] sm:$0xf]
        %v609 = vld [vmem:[%s390 + $0x1bc] sm:$0xf]
        %v610 = vld [vmem:[%s390 + $0x1c0] sm:$0xf]
        %v611 = vld [vmem:[%s390 + $0x1c4] sm:$0xf]
        %v612 = vld [vmem:[%s390 + $0x1c8] sm:$0xf]
        %v613 = vld [vmem:[%s390 + $0x1cc] sm:$0xf]
        %v614 = vld [vmem:[%s390 + $0x1d0] sm:$0xf]
        %v615 = vld [vmem:[%s390 + $0x1d4] sm:$0xf]
        %v616 = vld [vmem:[%s390 + $0x1d8] sm:$0xf]
        %v617 = vld [vmem:[%s390 + $0x1dc] sm:$0xf]
        %v618 = vld [vmem:[%s390 + $0x1e0] sm:$0xf]
        %v619 = vld [vmem:[%s390 + $0x1e4] sm:$0xf]
        %v620 = vld [vmem:[%s390 + $0x1e8] sm:$0xf]
        %v621 = vld [vmem:[%s390 + $0x1ec] sm:$0xf]
        %v622 = vld [vmem:[%s390 + $0x1f0] sm:$0xf]
        %v623 = vld [vmem:[%s390 + $0x1f4] sm:$0xf]
        %v624 = vld [vmem:[%s390 + $0x1f8] sm:$0xf]
        %v625 = vld [vmem:[%s390 + $0x1fc] sm:$0xf]
        %v626 = vld [vmem:[%s399] sm:$0xf]
        %v627 = vld [vmem:[%s399 + $0x4] sm:$0xf]
        %v628 = vld [vmem:[%s399 + $0x8] sm:$0xf]
        %v629 = vld [vmem:[%s399 + $0xc] sm:$0xf]
        %v630 = vld [vmem:[%s399 + $0x10] sm:$0xf]
        %v631 = vld [vmem:[%s399 + $0x14] sm:$0xf]
        %v632 = vld [vmem:[%s399 + $0x18] sm:$0xf]
        %v633 = vld [vmem:[%s399 + $0x1c] sm:$0xf]
        %v634 = vld [vmem:[%s399 + $0x20] sm:$0xf]
        %v635 = vld [vmem:[%s399 + $0x24] sm:$0xf]
        %v636 = vld [vmem:[%s399 + $0x28] sm:$0xf]
        %v637 = vld [vmem:[%s399 + $0x2c] sm:$0xf]
        %v638 = vld [vmem:[%s399 + $0x30] sm:$0xf]
        %v639 = vld [vmem:[%s399 + $0x34] sm:$0xf]
        %v640 = vld [vmem:[%s399 + $0x38] sm:$0xf]
        %v641 = vld [vmem:[%s399 + $0x3c] sm:$0xf]
        %v642 = vld [vmem:[%s399 + $0x40] sm:$0xf]
        %v643 = vld [vmem:[%s399 + $0x44] sm:$0xf]
        %v644 = vld [vmem:[%s399 + $0x48] sm:$0xf]
        %v645 = vld [vmem:[%s399 + $0x4c] sm:$0xf]
        %v646 = vld [vmem:[%s399 + $0x50] sm:$0xf]
        %v647 = vld [vmem:[%s399 + $0x54] sm:$0xf]
        %v648 = vld [vmem:[%s399 + $0x58] sm:$0xf]
        %v649 = vld [vmem:[%s399 + $0x5c] sm:$0xf]
        %v650 = vld [vmem:[%s399 + $0x60] sm:$0xf]
        %v651 = vld [vmem:[%s399 + $0x64] sm:$0xf]
        %v652 = vld [vmem:[%s399 + $0x68] sm:$0xf]
        %v653 = vld [vmem:[%s399 + $0x6c] sm:$0xf]
        %v654 = vld [vmem:[%s399 + $0x70] sm:$0xf]
        %v655 = vld [vmem:[%s399 + $0x74] sm:$0xf]
        %v656 = vld [vmem:[%s399 + $0x78] sm:$0xf]
        %v657 = vld [vmem:[%s399 + $0x7c] sm:$0xf]
        %v658 = vld [vmem:[%s399 + $0x80] sm:$0xf]
        %v659 = vld [vmem:[%s399 + $0x84] sm:$0xf]
        %v660 = vld [vmem:[%s399 + $0x88] sm:$0xf]
        %v661 = vld [vmem:[%s399 + $0x8c] sm:$0xf]
        %v662 = vld [vmem:[%s399 + $0x90] sm:$0xf]
        %v663 = vld [vmem:[%s399 + $0x94] sm:$0xf]
        %v664 = vld [vmem:[%s399 + $0x98] sm:$0xf]
        %v665 = vld [vmem:[%s399 + $0x9c] sm:$0xf]
        %v666 = vld [vmem:[%s399 + $0xa0] sm:$0xf]
        %v667 = vld [vmem:[%s399 + $0xa4] sm:$0xf]
        %v668 = vld [vmem:[%s399 + $0xa8] sm:$0xf]
        %v669 = vld [vmem:[%s399 + $0xac] sm:$0xf]
        %v670 = vld [vmem:[%s399 + $0xb0] sm:$0xf]
        %v671 = vld [vmem:[%s399 + $0xb4] sm:$0xf]
        %v672 = vld [vmem:[%s399 + $0xb8] sm:$0xf]
        %v673 = vld [vmem:[%s399 + $0xbc] sm:$0xf]
        %v674 = vld [vmem:[%s399 + $0xc0] sm:$0xf]
        %v675 = vld [vmem:[%s399 + $0xc4] sm:$0xf]
        %v676 = vld [vmem:[%s399 + $0xc8] sm:$0xf]
        %v677 = vld [vmem:[%s399 + $0xcc] sm:$0xf]
        %v678 = vld [vmem:[%s399 + $0xd0] sm:$0xf]
        %v679 = vld [vmem:[%s399 + $0xd4] sm:$0xf]
        %v680 = vld [vmem:[%s399 + $0xd8] sm:$0xf]
        %v681 = vld [vmem:[%s399 + $0xdc] sm:$0xf]
        %v682 = vld [vmem:[%s399 + $0xe0] sm:$0xf]
        %v683 = vld [vmem:[%s399 + $0xe4] sm:$0xf]
        %v684 = vld [vmem:[%s399 + $0xe8] sm:$0xf]
        %v685 = vld [vmem:[%s399 + $0xec] sm:$0xf]
        %v686 = vld [vmem:[%s399 + $0xf0] sm:$0xf]
        %v687 = vld [vmem:[%s399 + $0xf4] sm:$0xf]
        %v688 = vld [vmem:[%s399 + $0xf8] sm:$0xf]
        %v689 = vld [vmem:[%s399 + $0xfc] sm:$0xf]
        %v690 = vld [vmem:[%s399 + $0x100] sm:$0xf]
        %v691 = vld [vmem:[%s399 + $0x104] sm:$0xf]
        %v692 = vld [vmem:[%s399 + $0x108] sm:$0xf]
        %v693 = vld [vmem:[%s399 + $0x10c] sm:$0xf]
        %v694 = vld [vmem:[%s399 + $0x110] sm:$0xf]
        %v695 = vld [vmem:[%s399 + $0x114] sm:$0xf]
        %v696 = vld [vmem:[%s399 + $0x118] sm:$0xf]
        %v697 = vld [vmem:[%s399 + $0x11c] sm:$0xf]
        %v698 = vld [vmem:[%s399 + $0x120] sm:$0xf]
        %v699 = vld [vmem:[%s399 + $0x124] sm:$0xf]
        %v700 = vld [vmem:[%s399 + $0x128] sm:$0xf]
        %v701 = vld [vmem:[%s399 + $0x12c] sm:$0xf]
        %v702 = vld [vmem:[%s399 + $0x130] sm:$0xf]
        %v703 = vld [vmem:[%s399 + $0x134] sm:$0xf]
        %v704 = vld [vmem:[%s399 + $0x138] sm:$0xf]
        %v705 = vld [vmem:[%s399 + $0x13c] sm:$0xf]
        %v706 = vld [vmem:[%s399 + $0x140] sm:$0xf]
        %v707 = vld [vmem:[%s399 + $0x144] sm:$0xf]
        %v708 = vld [vmem:[%s399 + $0x148] sm:$0xf]
        %v709 = vld [vmem:[%s399 + $0x14c] sm:$0xf]
        %v710 = vld [vmem:[%s399 + $0x150] sm:$0xf]
        %v711 = vld [vmem:[%s399 + $0x154] sm:$0xf]
        %v712 = vld [vmem:[%s399 + $0x158] sm:$0xf]
        %v713 = vld [vmem:[%s399 + $0x15c] sm:$0xf]
        %v714 = vld [vmem:[%s399 + $0x160] sm:$0xf]
        %v715 = vld [vmem:[%s399 + $0x164] sm:$0xf]
        %v716 = vld [vmem:[%s399 + $0x168] sm:$0xf]
        %v717 = vld [vmem:[%s399 + $0x16c] sm:$0xf]
        %v718 = vld [vmem:[%s399 + $0x170] sm:$0xf]
        %v719 = vld [vmem:[%s399 + $0x174] sm:$0xf]
        %v720 = vld [vmem:[%s399 + $0x178] sm:$0xf]
        %v721 = vld [vmem:[%s399 + $0x17c] sm:$0xf]
        %v722 = vld [vmem:[%s399 + $0x180] sm:$0xf]
        %v723 = vld [vmem:[%s399 + $0x184] sm:$0xf]
        %v724 = vld [vmem:[%s399 + $0x188] sm:$0xf]
        %v725 = vld [vmem:[%s399 + $0x18c] sm:$0xf]
        %v726 = vld [vmem:[%s399 + $0x190] sm:$0xf]
        %v727 = vld [vmem:[%s399 + $0x194] sm:$0xf]
        %v728 = vld [vmem:[%s399 + $0x198] sm:$0xf]
        %v729 = vld [vmem:[%s399 + $0x19c] sm:$0xf]
        %v730 = vld [vmem:[%s399 + $0x1a0] sm:$0xf]
        %v731 = vld [vmem:[%s399 + $0x1a4] sm:$0xf]
        %v732 = vld [vmem:[%s399 + $0x1a8] sm:$0xf]
        %v733 = vld [vmem:[%s399 + $0x1ac] sm:$0xf]
        %v734 = vld [vmem:[%s399 + $0x1b0] sm:$0xf]
        %v735 = vld [vmem:[%s399 + $0x1b4] sm:$0xf]
        %v736 = vld [vmem:[%s399 + $0x1b8] sm:$0xf]
        %v737 = vld [vmem:[%s399 + $0x1bc] sm:$0xf]
        %v738 = vld [vmem:[%s399 + $0x1c0] sm:$0xf]
        %v739 = vld [vmem:[%s399 + $0x1c4] sm:$0xf]
        %v740 = vld [vmem:[%s399 + $0x1c8] sm:$0xf]
        %v741 = vld [vmem:[%s399 + $0x1cc] sm:$0xf]
        %v742 = vld [vmem:[%s399 + $0x1d0] sm:$0xf]
        %v743 = vld [vmem:[%s399 + $0x1d4] sm:$0xf]
        %v744 = vld [vmem:[%s399 + $0x1d8] sm:$0xf]
        %v745 = vld [vmem:[%s399 + $0x1dc] sm:$0xf]
        %v746 = vld [vmem:[%s399 + $0x1e0] sm:$0xf]
        %v747 = vld [vmem:[%s399 + $0x1e4] sm:$0xf]
        %v748 = vld [vmem:[%s399 + $0x1e8] sm:$0xf]
        %v749 = vld [vmem:[%s399 + $0x1ec] sm:$0xf]
        %v750 = vld [vmem:[%s399 + $0x1f0] sm:$0xf]
        %v751 = vld [vmem:[%s399 + $0x1f4] sm:$0xf]
        %v752 = vld [vmem:[%s399 + $0x1f8] sm:$0xf]
        %v753 = vld [vmem:[%s399 + $0x1fc] sm:$0xf]
        %v754 = vmul.bf16 %v498, %v626
        %v755 = vmul.bf16 %v499, %v627
        %v756 = vmul.bf16 %v500, %v628
        %v757 = vmul.bf16 %v501, %v629
        %v758 = vmul.bf16 %v502, %v630
        %v759 = vmul.bf16 %v503, %v631
        %v760 = vmul.bf16 %v504, %v632
        %v761 = vmul.bf16 %v505, %v633
        %v762 = vmul.bf16 %v506, %v634
        %v763 = vmul.bf16 %v507, %v635
        %v764 = vmul.bf16 %v508, %v636
        %v765 = vmul.bf16 %v509, %v637
        %v766 = vmul.bf16 %v510, %v638
        %v767 = vmul.bf16 %v511, %v639
        %v768 = vmul.bf16 %v512, %v640
        %v769 = vmul.bf16 %v513, %v641
        %v770 = vmul.bf16 %v514, %v642
        %v771 = vmul.bf16 %v515, %v643
        %v772 = vmul.bf16 %v516, %v644
        %v773 = vmul.bf16 %v517, %v645
        %v774 = vmul.bf16 %v518, %v646
        %v775 = vmul.bf16 %v519, %v647
        %v776 = vmul.bf16 %v520, %v648
        %v777 = vmul.bf16 %v521, %v649
        %v778 = vmul.bf16 %v522, %v650
        %v779 = vmul.bf16 %v523, %v651
        %v780 = vmul.bf16 %v524, %v652
        %v781 = vmul.bf16 %v525, %v653
        %v782 = vmul.bf16 %v526, %v654
        %v783 = vmul.bf16 %v527, %v655
        %v784 = vmul.bf16 %v528, %v656
        %v785 = vmul.bf16 %v529, %v657
        %v786 = vmul.bf16 %v530, %v658
        %v787 = vmul.bf16 %v531, %v659
        %v788 = vmul.bf16 %v532, %v660
        %v789 = vmul.bf16 %v533, %v661
        %v790 = vmul.bf16 %v534, %v662
        %v791 = vmul.bf16 %v535, %v663
        %v792 = vmul.bf16 %v536, %v664
        %v793 = vmul.bf16 %v537, %v665
        %v794 = vmul.bf16 %v538, %v666
        %v795 = vmul.bf16 %v539, %v667
        %v796 = vmul.bf16 %v540, %v668
        %v797 = vmul.bf16 %v541, %v669
        %v798 = vmul.bf16 %v542, %v670
        %v799 = vmul.bf16 %v543, %v671
        %v800 = vmul.bf16 %v544, %v672
        %v801 = vmul.bf16 %v545, %v673
        %v802 = vmul.bf16 %v546, %v674
        %v803 = vmul.bf16 %v547, %v675
        %v804 = vmul.bf16 %v548, %v676
        %v805 = vmul.bf16 %v549, %v677
        %v806 = vmul.bf16 %v550, %v678
        %v807 = vmul.bf16 %v551, %v679
        %v808 = vmul.bf16 %v552, %v680
        %v809 = vmul.bf16 %v553, %v681
        %v810 = vmul.bf16 %v554, %v682
        %v811 = vmul.bf16 %v555, %v683
        %v812 = vmul.bf16 %v556, %v684
        %v813 = vmul.bf16 %v557, %v685
        %v814 = vmul.bf16 %v558, %v686
        %v815 = vmul.bf16 %v559, %v687
        %v816 = vmul.bf16 %v560, %v688
        %v817 = vmul.bf16 %v561, %v689
        %v818 = vmul.bf16 %v562, %v690
        %v819 = vmul.bf16 %v563, %v691
        %v820 = vmul.bf16 %v564, %v692
        %v821 = vmul.bf16 %v565, %v693
        %v822 = vmul.bf16 %v566, %v694
        %v823 = vmul.bf16 %v567, %v695
        %v824 = vmul.bf16 %v568, %v696
        %v825 = vmul.bf16 %v569, %v697
        %v826 = vmul.bf16 %v570, %v698
        %v827 = vmul.bf16 %v571, %v699
        %v828 = vmul.bf16 %v572, %v700
        %v829 = vmul.bf16 %v573, %v701
        %v830 = vmul.bf16 %v574, %v702
        %v831 = vmul.bf16 %v575, %v703
        %v832 = vmul.bf16 %v576, %v704
        %v833 = vmul.bf16 %v577, %v705
        %v834 = vmul.bf16 %v578, %v706
        %v835 = vmul.bf16 %v579, %v707
        %v836 = vmul.bf16 %v580, %v708
        %v837 = vmul.bf16 %v581, %v709
        %v838 = vmul.bf16 %v582, %v710
        %v839 = vmul.bf16 %v583, %v711
        %v840 = vmul.bf16 %v584, %v712
        %v841 = vmul.bf16 %v585, %v713
        %v842 = vmul.bf16 %v586, %v714
        %v843 = vmul.bf16 %v587, %v715
        %v844 = vmul.bf16 %v588, %v716
        %v845 = vmul.bf16 %v589, %v717
        %v846 = vmul.bf16 %v590, %v718
        %v847 = vmul.bf16 %v591, %v719
        %v848 = vmul.bf16 %v592, %v720
        %v849 = vmul.bf16 %v593, %v721
        %v850 = vmul.bf16 %v594, %v722
        %v851 = vmul.bf16 %v595, %v723
        %v852 = vmul.bf16 %v596, %v724
        %v853 = vmul.bf16 %v597, %v725
        %v854 = vmul.bf16 %v598, %v726
        %v855 = vmul.bf16 %v599, %v727
        %v856 = vmul.bf16 %v600, %v728
        %v857 = vmul.bf16 %v601, %v729
        %v858 = vmul.bf16 %v602, %v730
        %v859 = vmul.bf16 %v603, %v731
        %v860 = vmul.bf16 %v604, %v732
        %v861 = vmul.bf16 %v605, %v733
        %v862 = vmul.bf16 %v606, %v734
        %v863 = vmul.bf16 %v607, %v735
        %v864 = vmul.bf16 %v608, %v736
        %v865 = vmul.bf16 %v609, %v737
        %v866 = vmul.bf16 %v610, %v738
        %v867 = vmul.bf16 %v611, %v739
        %v868 = vmul.bf16 %v612, %v740
        %v869 = vmul.bf16 %v613, %v741
        %v870 = vmul.bf16 %v614, %v742
        %v871 = vmul.bf16 %v615, %v743
        %v872 = vmul.bf16 %v616, %v744
        %v873 = vmul.bf16 %v617, %v745
        %v874 = vmul.bf16 %v618, %v746
        %v875 = vmul.bf16 %v619, %v747
        %v876 = vmul.bf16 %v620, %v748
        %v877 = vmul.bf16 %v621, %v749
        %v878 = vmul.bf16 %v622, %v750
        %v879 = vmul.bf16 %v623, %v751
        %v880 = vmul.bf16 %v624, %v752
        %v881 = vmul.bf16 %v625, %v753
        %v882 = vld [vmem:[%s417] sm:$0xf]
        %v883 = vld [vmem:[%s417 + $0x4] sm:$0xf]
        %v884 = vld [vmem:[%s417 + $0x8] sm:$0xf]
        %v885 = vld [vmem:[%s417 + $0xc] sm:$0xf]
        %v886 = vld [vmem:[%s417 + $0x10] sm:$0xf]
        %v887 = vld [vmem:[%s417 + $0x14] sm:$0xf]
        %v888 = vld [vmem:[%s417 + $0x18] sm:$0xf]
        %v889 = vld [vmem:[%s417 + $0x1c] sm:$0xf]
        %v890 = vld [vmem:[%s417 + $0x20] sm:$0xf]
        %v891 = vld [vmem:[%s417 + $0x24] sm:$0xf]
        %v892 = vld [vmem:[%s417 + $0x28] sm:$0xf]
        %v893 = vld [vmem:[%s417 + $0x2c] sm:$0xf]
        %v894 = vld [vmem:[%s417 + $0x30] sm:$0xf]
        %v895 = vld [vmem:[%s417 + $0x34] sm:$0xf]
        %v896 = vld [vmem:[%s417 + $0x38] sm:$0xf]
        %v897 = vld [vmem:[%s417 + $0x3c] sm:$0xf]
        %v1026 = vunpack.c.l.b16 %v754
        %v1027 = vunpack.c.l.b16 %v755
        %v1028 = vunpack.c.l.b16 %v756
        %v1029 = vunpack.c.l.b16 %v757
        %v1030 = vunpack.c.l.b16 %v758
        %v1031 = vunpack.c.l.b16 %v759
        %v1032 = vunpack.c.l.b16 %v760
        %v1033 = vunpack.c.l.b16 %v761
        %v1034 = vunpack.c.l.b16 %v762
        %v1035 = vunpack.c.l.b16 %v763
        %v1036 = vunpack.c.l.b16 %v764
        %v1037 = vunpack.c.l.b16 %v765
        %v1038 = vunpack.c.l.b16 %v766
        %v1039 = vunpack.c.l.b16 %v767
        %v1040 = vunpack.c.l.b16 %v768
        %v1041 = vunpack.c.l.b16 %v769
        %v1042 = vunpack.c.l.b16 %v770
        %v1043 = vunpack.c.l.b16 %v771
        %v1044 = vunpack.c.l.b16 %v772
        %v1045 = vunpack.c.l.b16 %v773
        %v1046 = vunpack.c.l.b16 %v774
        %v1047 = vunpack.c.l.b16 %v775
        %v1048 = vunpack.c.l.b16 %v776
        %v1049 = vunpack.c.l.b16 %v777
        %v1050 = vunpack.c.l.b16 %v778
        %v1051 = vunpack.c.l.b16 %v779
        %v1052 = vunpack.c.l.b16 %v780
        %v1053 = vunpack.c.l.b16 %v781
        %v1054 = vunpack.c.l.b16 %v782
        %v1055 = vunpack.c.l.b16 %v783
        %v1056 = vunpack.c.l.b16 %v784
        %v1057 = vunpack.c.l.b16 %v785
        %v1058 = vunpack.c.l.b16 %v786
        %v1059 = vunpack.c.l.b16 %v787
        %v1060 = vunpack.c.l.b16 %v788
        %v1061 = vunpack.c.l.b16 %v789
        %v1062 = vunpack.c.l.b16 %v790
        %v1063 = vunpack.c.l.b16 %v791
        %v1064 = vunpack.c.l.b16 %v792
        %v1065 = vunpack.c.l.b16 %v793
        %v1066 = vunpack.c.l.b16 %v794
        %v1067 = vunpack.c.l.b16 %v795
        %v1068 = vunpack.c.l.b16 %v796
        %v1069 = vunpack.c.l.b16 %v797
        %v1070 = vunpack.c.l.b16 %v798
        %v1071 = vunpack.c.l.b16 %v799
        %v1072 = vunpack.c.l.b16 %v800
        %v1073 = vunpack.c.l.b16 %v801
        %v1074 = vunpack.c.l.b16 %v802
        %v1075 = vunpack.c.l.b16 %v803
        %v1076 = vunpack.c.l.b16 %v804
        %v1077 = vunpack.c.l.b16 %v805
        %v1078 = vunpack.c.l.b16 %v806
        %v1079 = vunpack.c.l.b16 %v807
        %v1080 = vunpack.c.l.b16 %v808
        %v1081 = vunpack.c.l.b16 %v809
        %v1082 = vunpack.c.l.b16 %v810
        %v1083 = vunpack.c.l.b16 %v811
        %v1084 = vunpack.c.l.b16 %v812
        %v1085 = vunpack.c.l.b16 %v813
        %v1086 = vunpack.c.l.b16 %v814
        %v1087 = vunpack.c.l.b16 %v815
        %v1088 = vunpack.c.l.b16 %v816
        %v1089 = vunpack.c.l.b16 %v817
        %v1090 = vunpack.c.l.b16 %v818
        %v1091 = vunpack.c.l.b16 %v819
        %v1092 = vunpack.c.l.b16 %v820
        %v1093 = vunpack.c.l.b16 %v821
        %v1094 = vunpack.c.l.b16 %v822
        %v1095 = vunpack.c.l.b16 %v823
        %v1096 = vunpack.c.l.b16 %v824
        %v1097 = vunpack.c.l.b16 %v825
        %v1098 = vunpack.c.l.b16 %v826
        %v1099 = vunpack.c.l.b16 %v827
        %v1100 = vunpack.c.l.b16 %v828
        %v1101 = vunpack.c.l.b16 %v829
        %v1102 = vunpack.c.l.b16 %v830
        %v1103 = vunpack.c.l.b16 %v831
        %v1104 = vunpack.c.l.b16 %v832
        %v1105 = vunpack.c.l.b16 %v833
        %v1106 = vunpack.c.l.b16 %v834
        %v1107 = vunpack.c.l.b16 %v835
        %v1108 = vunpack.c.l.b16 %v836
        %v1109 = vunpack.c.l.b16 %v837
        %v1110 = vunpack.c.l.b16 %v838
        %v1111 = vunpack.c.l.b16 %v839
        %v1112 = vunpack.c.l.b16 %v840
        %v1113 = vunpack.c.l.b16 %v841
        %v1114 = vunpack.c.l.b16 %v842
        %v1115 = vunpack.c.l.b16 %v843
        %v1116 = vunpack.c.l.b16 %v844
        %v1117 = vunpack.c.l.b16 %v845
        %v1118 = vunpack.c.l.b16 %v846
        %v1119 = vunpack.c.l.b16 %v847
        %v1120 = vunpack.c.l.b16 %v848
        %v1121 = vunpack.c.l.b16 %v849
        %v1122 = vunpack.c.l.b16 %v850
        %v1123 = vunpack.c.l.b16 %v851
        %v1124 = vunpack.c.l.b16 %v852
        %v1125 = vunpack.c.l.b16 %v853
        %v1126 = vunpack.c.l.b16 %v854
        %v1127 = vunpack.c.l.b16 %v855
        %v1128 = vunpack.c.l.b16 %v856
        %v1129 = vunpack.c.l.b16 %v857
        %v1130 = vunpack.c.l.b16 %v858
        %v1131 = vunpack.c.l.b16 %v859
        %v1132 = vunpack.c.l.b16 %v860
        %v1133 = vunpack.c.l.b16 %v861
        %v1134 = vunpack.c.l.b16 %v862
        %v1135 = vunpack.c.l.b16 %v863
        %v1136 = vunpack.c.l.b16 %v864
        %v1137 = vunpack.c.l.b16 %v865
        %v1138 = vunpack.c.l.b16 %v866
        %v1139 = vunpack.c.l.b16 %v867
        %v1140 = vunpack.c.l.b16 %v868
        %v1141 = vunpack.c.l.b16 %v869
        %v1142 = vunpack.c.l.b16 %v870
        %v1143 = vunpack.c.l.b16 %v871
        %v1144 = vunpack.c.l.b16 %v872
        %v1145 = vunpack.c.l.b16 %v873
        %v1146 = vunpack.c.l.b16 %v874
        %v1147 = vunpack.c.l.b16 %v875
        %v1148 = vunpack.c.l.b16 %v876
        %v1149 = vunpack.c.l.b16 %v877
        %v1150 = vunpack.c.l.b16 %v878
        %v1151 = vunpack.c.l.b16 %v879
        %v1152 = vunpack.c.l.b16 %v880
        %v1153 = vunpack.c.l.b16 %v881
        %v1154 = vpack.c.b16 %v1027, %v1026
        %v1155 = vpack.c.b16 %v1029, %v1028
        %v1156 = vpack.c.b16 %v1031, %v1030
        %v1157 = vpack.c.b16 %v1033, %v1032
        %v1158 = vpack.c.b16 %v1035, %v1034
        %v1159 = vpack.c.b16 %v1037, %v1036
        %v1160 = vpack.c.b16 %v1039, %v1038
        %v1161 = vpack.c.b16 %v1041, %v1040
        %v1162 = vpack.c.b16 %v1043, %v1042
        %v1163 = vpack.c.b16 %v1045, %v1044
        %v1164 = vpack.c.b16 %v1047, %v1046
        %v1165 = vpack.c.b16 %v1049, %v1048
        %v1166 = vpack.c.b16 %v1051, %v1050
        %v1167 = vpack.c.b16 %v1053, %v1052
        %v1168 = vpack.c.b16 %v1055, %v1054
        %v1169 = vpack.c.b16 %v1057, %v1056
        %v1170 = vpack.c.b16 %v1059, %v1058
        %v1171 = vpack.c.b16 %v1061, %v1060
        %v1172 = vpack.c.b16 %v1063, %v1062
        %v1173 = vpack.c.b16 %v1065, %v1064
        %v1174 = vpack.c.b16 %v1067, %v1066
        %v1175 = vpack.c.b16 %v1069, %v1068
        %v1176 = vpack.c.b16 %v1071, %v1070
        %v1177 = vpack.c.b16 %v1073, %v1072
        %v1178 = vpack.c.b16 %v1075, %v1074
        %v1179 = vpack.c.b16 %v1077, %v1076
        %v1180 = vpack.c.b16 %v1079, %v1078
        %v1181 = vpack.c.b16 %v1081, %v1080
        %v1182 = vpack.c.b16 %v1083, %v1082
        %v1183 = vpack.c.b16 %v1085, %v1084
        %v1184 = vpack.c.b16 %v1087, %v1086
        %v1185 = vpack.c.b16 %v1089, %v1088
        %v1186 = vpack.c.b16 %v1091, %v1090
        %v1187 = vpack.c.b16 %v1093, %v1092
        %v1188 = vpack.c.b16 %v1095, %v1094
        %v1189 = vpack.c.b16 %v1097, %v1096
        %v1190 = vpack.c.b16 %v1099, %v1098
        %v1191 = vpack.c.b16 %v1101, %v1100
        %v1192 = vpack.c.b16 %v1103, %v1102
        %v1193 = vpack.c.b16 %v1105, %v1104
        %v1194 = vpack.c.b16 %v1107, %v1106
        %v1195 = vpack.c.b16 %v1109, %v1108
        %v1196 = vpack.c.b16 %v1111, %v1110
        %v1197 = vpack.c.b16 %v1113, %v1112
        %v1198 = vpack.c.b16 %v1115, %v1114
        %v1199 = vpack.c.b16 %v1117, %v1116
        %v1200 = vpack.c.b16 %v1119, %v1118
        %v1201 = vpack.c.b16 %v1121, %v1120
        %v1202 = vpack.c.b16 %v1123, %v1122
        %v1203 = vpack.c.b16 %v1125, %v1124
        %v1204 = vpack.c.b16 %v1127, %v1126
        %v1205 = vpack.c.b16 %v1129, %v1128
        %v1206 = vpack.c.b16 %v1131, %v1130
        %v1207 = vpack.c.b16 %v1133, %v1132
        %v1208 = vpack.c.b16 %v1135, %v1134
        %v1209 = vpack.c.b16 %v1137, %v1136
        %v1210 = vpack.c.b16 %v1139, %v1138
        %v1211 = vpack.c.b16 %v1141, %v1140
        %v1212 = vpack.c.b16 %v1143, %v1142
        %v1213 = vpack.c.b16 %v1145, %v1144
        %v1214 = vpack.c.b16 %v1147, %v1146
        %v1215 = vpack.c.b16 %v1149, %v1148
        %v1216 = vpack.c.b16 %v1151, %v1150
        %v1217 = vpack.c.b16 %v1153, %v1152
        %v1298 = vunpack.c.l.b16 %v882
        %v1299 = vunpack.c.l.b16 %v883
        %v1300 = vunpack.c.l.b16 %v884
        %v1301 = vunpack.c.l.b16 %v885
        %v1302 = vunpack.c.l.b16 %v886
        %v1303 = vunpack.c.l.b16 %v887
        %v1304 = vunpack.c.l.b16 %v888
        %v1305 = vunpack.c.l.b16 %v889
        %v1306 = vunpack.c.l.b16 %v890
        %v1307 = vunpack.c.l.b16 %v891
        %v1308 = vunpack.c.l.b16 %v892
        %v1309 = vunpack.c.l.b16 %v893
        %v1310 = vunpack.c.l.b16 %v894
        %v1311 = vunpack.c.l.b16 %v895
        %v1312 = vunpack.c.l.b16 %v896
        %v1313 = vunpack.c.l.b16 %v897
        %v1314 = vpack.c.b16 %v1299, %v1298
        %v1315 = vpack.c.b16 %v1301, %v1300
        %v1316 = vpack.c.b16 %v1303, %v1302
        %v1317 = vpack.c.b16 %v1305, %v1304
        %v1318 = vpack.c.b16 %v1307, %v1306
        %v1319 = vpack.c.b16 %v1309, %v1308
        %v1320 = vpack.c.b16 %v1311, %v1310
        %v1321 = vpack.c.b16 %v1313, %v1312
        %1330 = vmatprep.subr.bf16.mxu0 0
        %1331 = vmatpush1.bf16.msra.mxu0 %v1314
        %1332 = vmatprep.subr.bf16.mxu0 0
        %1333 = vmatpush1.bf16.msra.mxu0 %v1315
        %1334 = vmatprep.subr.bf16.mxu0 0
        %1335 = vmatpush1.bf16.msra.mxu0 %v1316
        %1336 = vmatprep.subr.bf16.mxu0 0
        %1337 = vmatpush1.bf16.msra.mxu0 %v1317
        %1338 = vmatprep.subr.bf16.mxu0 0
        %1339 = vmatpush1.bf16.msra.mxu0 %v1318
        %1340 = vmatprep.subr.bf16.mxu0 0
        %1341 = vmatpush1.bf16.msra.mxu0 %v1319
        %1342 = vmatprep.subr.bf16.mxu0 0
        %1343 = vmatpush1.bf16.msra.mxu0 %v1320
        %1344 = vmatprep.subr.bf16.mxu0 0
        %1345 = vmatpush1.bf16.msra.mxu0 %v1321
        %1346 = vmatprep.subr.bf16.mxu0 0
        %1347 = vmatpush1.bf16.msra.mxu0 0
        %1348 = vmatprep.subr.bf16.mxu0 0
        %1349 = vmatpush1.bf16.msra.mxu0 0
        %1350 = vmatprep.subr.bf16.mxu0 0
        %1351 = vmatpush1.bf16.msra.mxu0 0
        %1352 = vmatprep.subr.bf16.mxu0 0
        %1353 = vmatpush1.bf16.msra.mxu0 0
        %1354 = vmatprep.subr.bf16.mxu0 0
        %1355 = vmatpush1.bf16.msra.mxu0 0
        %1356 = vmatprep.subr.bf16.mxu0 0
        %1357 = vmatpush1.bf16.msra.mxu0 0
        %1358 = vmatprep.subr.bf16.mxu0 0
        %1359 = vmatpush1.bf16.msra.mxu0 0
        %1360 = vmatprep.subr.bf16.mxu0 0
        %1361 = vmatpush1.bf16.msra.mxu0 0
        %1362 = vmatprep.mubr.bf16.mxu0 0
        %1363 = vmatmul.mubr.bf16.gmra.mrb[0].mxu0 %v1154
        %v1364 = vpop.f32.mrb[0].mxu0
        %v1365 = vadd.f32 0.0, %v1364
        %v1366 = vpop.f32.mrb[0].mxu0
        %v1367 = vpop.f32.mrb[0].mxu0
        %v1368 = vadd.f32 0.0, %v1367
        %v1369 = vpop.f32.mrb[0].mxu0
        %1370 = vmatprep.mubr.bf16.mxu0 0
        %1371 = vmatmul.mubr.bf16.gmra.mrb[0].mxu0 %v1155
        %v1372 = vpop.f32.mrb[0].mxu0
        %v1373 = vadd.f32 0.0, %v1372
        %v1374 = vpop.f32.mrb[0].mxu0
        %v1375 = vpop.f32.mrb[0].mxu0
        %v1376 = vadd.f32 0.0, %v1375
        %v1377 = vpop.f32.mrb[0].mxu0
        %1378 = vmatprep.mubr.bf16.mxu0 0
        %1379 = vmatmul.mubr.bf16.gmra.mrb[0].mxu0 %v1156
        %v1380 = vpop.f32.mrb[0].mxu0
        %v1381 = vadd.f32 0.0, %v1380
        %v1382 = vpop.f32.mrb[0].mxu0
        %v1383 = vpop.f32.mrb[0].mxu0
        %v1384 = vadd.f32 0.0, %v1383
        %v1385 = vpop.f32.mrb[0].mxu0
        %1386 = vmatprep.mubr.bf16.mxu0 0
        %1387 = vmatmul.mubr.bf16.gmra.mrb[0].mxu0 %v1157
        %v1388 = vpop.f32.mrb[0].mxu0
        %v1389 = vadd.f32 0.0, %v1388
        %v1390 = vpop.f32.mrb[0].mxu0
        %v1391 = vpop.f32.mrb[0].mxu0
        %v1392 = vadd.f32 0.0, %v1391
        %v1393 = vpop.f32.mrb[0].mxu0
        %1394 = vmatprep.mubr.bf16.mxu0 0
        %1395 = vmatmul.mubr.bf16.gmra.mrb[0].mxu0 %v1158
        %v1396 = vpop.f32.mrb[0].mxu0
        %v1397 = vadd.f32 0.0, %v1396
        %v1398 = vpop.f32.mrb[0].mxu0
        %v1399 = vpop.f32.mrb[0].mxu0
        %v1400 = vadd.f32 0.0, %v1399
        %v1401 = vpop.f32.mrb[0].mxu0
        %1402 = vmatprep.mubr.bf16.mxu0 0
        %1403 = vmatmul.mubr.bf16.gmra.mrb[0].mxu0 %v1159
        %v1404 = vpop.f32.mrb[0].mxu0
        %v1405 = vadd.f32 0.0, %v1404
        %v1406 = vpop.f32.mrb[0].mxu0
        %v1407 = vpop.f32.mrb[0].mxu0
        %v1408 = vadd.f32 0.0, %v1407
        %v1409 = vpop.f32.mrb[0].mxu0
        %1410 = vmatprep.mubr.bf16.mxu0 0
        %1411 = vmatmul.mubr.bf16.gmra.mrb[0].mxu0 %v1160
        %v1412 = vpop.f32.mrb[0].mxu0
        %v1413 = vadd.f32 0.0, %v1412
        %v1414 = vpop.f32.mrb[0].mxu0
        %v1415 = vpop.f32.mrb[0].mxu0
        %v1416 = vadd.f32 0.0, %v1415
        %v1417 = vpop.f32.mrb[0].mxu0
        %1418 = vmatprep.mubr.bf16.mxu0 0
        %1419 = vmatmul.mubr.bf16.gmra.mrb[0].mxu0 %v1161
        %v1420 = vpop.f32.mrb[0].mxu0
        %v1421 = vadd.f32 0.0, %v1420
        %v1422 = vpop.f32.mrb[0].mxu0
        %v1423 = vpop.f32.mrb[0].mxu0
        %v1424 = vadd.f32 0.0, %v1423
        %v1425 = vpop.f32.mrb[0].mxu0
        %1426 = vmatprep.mubr.bf16.mxu0 0
        %1427 = vmatmul.mubr.bf16.gmra.mrb[0].mxu0 %v1162
        %v1428 = vpop.f32.mrb[0].mxu0
        %v1429 = vadd.f32 0.0, %v1428
        %v1430 = vpop.f32.mrb[0].mxu0
        %v1431 = vpop.f32.mrb[0].mxu0
        %v1432 = vadd.f32 0.0, %v1431
        %v1433 = vpop.f32.mrb[0].mxu0
        %1434 = vmatprep.mubr.bf16.mxu0 0
        %1435 = vmatmul.mubr.bf16.gmra.mrb[0].mxu0 %v1163
        %v1436 = vpop.f32.mrb[0].mxu0
        %v1437 = vadd.f32 0.0, %v1436
        %v1438 = vpop.f32.mrb[0].mxu0
        %v1439 = vpop.f32.mrb[0].mxu0
        %v1440 = vadd.f32 0.0, %v1439
        %v1441 = vpop.f32.mrb[0].mxu0
        %1442 = vmatprep.mubr.bf16.mxu0 0
        %1443 = vmatmul.mubr.bf16.gmra.mrb[0].mxu0 %v1164
        %v1444 = vpop.f32.mrb[0].mxu0
        %v1445 = vadd.f32 0.0, %v1444
        %v1446 = vpop.f32.mrb[0].mxu0
        %v1447 = vpop.f32.mrb[0].mxu0
        %v1448 = vadd.f32 0.0, %v1447
        %v1449 = vpop.f32.mrb[0].mxu0
        %1450 = vmatprep.mubr.bf16.mxu0 0
        %1451 = vmatmul.mubr.bf16.gmra.mrb[0].mxu0 %v1165
        %v1452 = vpop.f32.mrb[0].mxu0
        %v1453 = vadd.f32 0.0, %v1452
        %v1454 = vpop.f32.mrb[0].mxu0
        %v1455 = vpop.f32.mrb[0].mxu0
        %v1456 = vadd.f32 0.0, %v1455
        %v1457 = vpop.f32.mrb[0].mxu0
        %1458 = vmatprep.mubr.bf16.mxu0 0
        %1459 = vmatmul.mubr.bf16.gmra.mrb[0].mxu0 %v1166
        %v1460 = vpop.f32.mrb[0].mxu0
        %v1461 = vadd.f32 0.0, %v1460
        %v1462 = vpop.f32.mrb[0].mxu0
        %v1463 = vpop.f32.mrb[0].mxu0
        %v1464 = vadd.f32 0.0, %v1463
        %v1465 = vpop.f32.mrb[0].mxu0
        %1466 = vmatprep.mubr.bf16.mxu0 0
        %1467 = vmatmul.mubr.bf16.gmra.mrb[0].mxu0 %v1167
        %v1468 = vpop.f32.mrb[0].mxu0
        %v1469 = vadd.f32 0.0, %v1468
        %v1470 = vpop.f32.mrb[0].mxu0
        %v1471 = vpop.f32.mrb[0].mxu0
        %v1472 = vadd.f32 0.0, %v1471
        %v1473 = vpop.f32.mrb[0].mxu0
        %1474 = vmatprep.mubr.bf16.mxu0 0
        %1475 = vmatmul.mubr.bf16.gmra.mrb[0].mxu0 %v1168
        %v1476 = vpop.f32.mrb[0].mxu0
        %v1477 = vadd.f32 0.0, %v1476
        %v1478 = vpop.f32.mrb[0].mxu0
        %v1479 = vpop.f32.mrb[0].mxu0
        %v1480 = vadd.f32 0.0, %v1479
        %v1481 = vpop.f32.mrb[0].mxu0
        %1482 = vmatprep.mubr.bf16.mxu0 0
        %1483 = vmatmul.mubr.bf16.gmra.mrb[0].mxu0 %v1169
        %v1484 = vpop.f32.mrb[0].mxu0
        %v1485 = vadd.f32 0.0, %v1484
        %v1486 = vpop.f32.mrb[0].mxu0
        %v1487 = vpop.f32.mrb[0].mxu0
        %v1488 = vadd.f32 0.0, %v1487
        %v1489 = vpop.f32.mrb[0].mxu0
        %1490 = vmatprep.mubr.bf16.mxu0 0
        %1491 = vmatmul.mubr.bf16.gmra.mrb[0].mxu0 %v1170
        %v1492 = vpop.f32.mrb[0].mxu0
        %v1493 = vadd.f32 0.0, %v1492
        %v1494 = vpop.f32.mrb[0].mxu0
        %v1495 = vpop.f32.mrb[0].mxu0
        %v1496 = vadd.f32 0.0, %v1495
        %v1497 = vpop.f32.mrb[0].mxu0
        %1498 = vmatprep.mubr.bf16.mxu0 0
        %1499 = vmatmul.mubr.bf16.gmra.mrb[0].mxu0 %v1171
        %v1500 = vpop.f32.mrb[0].mxu0
        %v1501 = vadd.f32 0.0, %v1500
        %v1502 = vpop.f32.mrb[0].mxu0
        %v1503 = vpop.f32.mrb[0].mxu0
        %v1504 = vadd.f32 0.0, %v1503
        %v1505 = vpop.f32.mrb[0].mxu0
        %1506 = vmatprep.mubr.bf16.mxu0 0
        %1507 = vmatmul.mubr.bf16.gmra.mrb[0].mxu0 %v1172
        %v1508 = vpop.f32.mrb[0].mxu0
        %v1509 = vadd.f32 0.0, %v1508
        %v1510 = vpop.f32.mrb[0].mxu0
        %v1511 = vpop.f32.mrb[0].mxu0
        %v1512 = vadd.f32 0.0, %v1511
        %v1513 = vpop.f32.mrb[0].mxu0
        %1514 = vmatprep.mubr.bf16.mxu0 0
        %1515 = vmatmul.mubr.bf16.gmra.mrb[0].mxu0 %v1173
        %v1516 = vpop.f32.mrb[0].mxu0
        %v1517 = vadd.f32 0.0, %v1516
        %v1518 = vpop.f32.mrb[0].mxu0
        %v1519 = vpop.f32.mrb[0].mxu0
        %v1520 = vadd.f32 0.0, %v1519
        %v1521 = vpop.f32.mrb[0].mxu0
        %1522 = vmatprep.mubr.bf16.mxu0 0
        %1523 = vmatmul.mubr.bf16.gmra.mrb[0].mxu0 %v1174
        %v1524 = vpop.f32.mrb[0].mxu0
        %v1525 = vadd.f32 0.0, %v1524
        %v1526 = vpop.f32.mrb[0].mxu0
        %v1527 = vpop.f32.mrb[0].mxu0
        %v1528 = vadd.f32 0.0, %v1527
        %v1529 = vpop.f32.mrb[0].mxu0
        %1530 = vmatprep.mubr.bf16.mxu0 0
        %1531 = vmatmul.mubr.bf16.gmra.mrb[0].mxu0 %v1175
        %v1532 = vpop.f32.mrb[0].mxu0
        %v1533 = vadd.f32 0.0, %v1532
        %v1534 = vpop.f32.mrb[0].mxu0
        %v1535 = vpop.f32.mrb[0].mxu0
        %v1536 = vadd.f32 0.0, %v1535
        %v1537 = vpop.f32.mrb[0].mxu0
        %1538 = vmatprep.mubr.bf16.mxu0 0
        %1539 = vmatmul.mubr.bf16.gmra.mrb[0].mxu0 %v1176
        %v1540 = vpop.f32.mrb[0].mxu0
        %v1541 = vadd.f32 0.0, %v1540
        %v1542 = vpop.f32.mrb[0].mxu0
        %v1543 = vpop.f32.mrb[0].mxu0
        %v1544 = vadd.f32 0.0, %v1543
        %v1545 = vpop.f32.mrb[0].mxu0
        %1546 = vmatprep.mubr.bf16.mxu0 0
        %1547 = vmatmul.mubr.bf16.gmra.mrb[0].mxu0 %v1177
        %v1548 = vpop.f32.mrb[0].mxu0
        %v1549 = vadd.f32 0.0, %v1548
        %v1550 = vpop.f32.mrb[0].mxu0
        %v1551 = vpop.f32.mrb[0].mxu0
        %v1552 = vadd.f32 0.0, %v1551
        %v1553 = vpop.f32.mrb[0].mxu0
        %1554 = vmatprep.mubr.bf16.mxu0 0
        %1555 = vmatmul.mubr.bf16.gmra.mrb[0].mxu0 %v1178
        %v1556 = vpop.f32.mrb[0].mxu0
        %v1557 = vadd.f32 0.0, %v1556
        %v1558 = vpop.f32.mrb[0].mxu0
        %v1559 = vpop.f32.mrb[0].mxu0
        %v1560 = vadd.f32 0.0, %v1559
        %v1561 = vpop.f32.mrb[0].mxu0
        %1562 = vmatprep.mubr.bf16.mxu0 0
        %1563 = vmatmul.mubr.bf16.gmra.mrb[0].mxu0 %v1179
        %v1564 = vpop.f32.mrb[0].mxu0
        %v1565 = vadd.f32 0.0, %v1564
        %v1566 = vpop.f32.mrb[0].mxu0
        %v1567 = vpop.f32.mrb[0].mxu0
        %v1568 = vadd.f32 0.0, %v1567
        %v1569 = vpop.f32.mrb[0].mxu0
        %1570 = vmatprep.mubr.bf16.mxu0 0
        %1571 = vmatmul.mubr.bf16.gmra.mrb[0].mxu0 %v1180
        %v1572 = vpop.f32.mrb[0].mxu0
        %v1573 = vadd.f32 0.0, %v1572
        %v1574 = vpop.f32.mrb[0].mxu0
        %v1575 = vpop.f32.mrb[0].mxu0
        %v1576 = vadd.f32 0.0, %v1575
        %v1577 = vpop.f32.mrb[0].mxu0
        %1578 = vmatprep.mubr.bf16.mxu0 0
        %1579 = vmatmul.mubr.bf16.gmra.mrb[0].mxu0 %v1181
        %v1580 = vpop.f32.mrb[0].mxu0
        %v1581 = vadd.f32 0.0, %v1580
        %v1582 = vpop.f32.mrb[0].mxu0
        %v1583 = vpop.f32.mrb[0].mxu0
        %v1584 = vadd.f32 0.0, %v1583
        %v1585 = vpop.f32.mrb[0].mxu0
        %1586 = vmatprep.mubr.bf16.mxu0 0
        %1587 = vmatmul.mubr.bf16.gmra.mrb[0].mxu0 %v1182
        %v1588 = vpop.f32.mrb[0].mxu0
        %v1589 = vadd.f32 0.0, %v1588
        %v1590 = vpop.f32.mrb[0].mxu0
        %v1591 = vpop.f32.mrb[0].mxu0
        %v1592 = vadd.f32 0.0, %v1591
        %v1593 = vpop.f32.mrb[0].mxu0
        %1594 = vmatprep.mubr.bf16.mxu0 0
        %1595 = vmatmul.mubr.bf16.gmra.mrb[0].mxu0 %v1183
        %v1596 = vpop.f32.mrb[0].mxu0
        %v1597 = vadd.f32 0.0, %v1596
        %v1598 = vpop.f32.mrb[0].mxu0
        %v1599 = vpop.f32.mrb[0].mxu0
        %v1600 = vadd.f32 0.0, %v1599
        %v1601 = vpop.f32.mrb[0].mxu0
        %1602 = vmatprep.mubr.bf16.mxu0 0
        %1603 = vmatmul.mubr.bf16.gmra.mrb[0].mxu0 %v1184
        %v1604 = vpop.f32.mrb[0].mxu0
        %v1605 = vadd.f32 0.0, %v1604
        %v1606 = vpop.f32.mrb[0].mxu0
        %v1607 = vpop.f32.mrb[0].mxu0
        %v1608 = vadd.f32 0.0, %v1607
        %v1609 = vpop.f32.mrb[0].mxu0
        %1610 = vmatprep.mubr.bf16.mxu0 0
        %1611 = vmatmul.mubr.bf16.gmra.mrb[0].mxu0 %v1185
        %v1612 = vpop.f32.mrb[0].mxu0
        %v1613 = vadd.f32 0.0, %v1612
        %v1614 = vpop.f32.mrb[0].mxu0
        %v1615 = vpop.f32.mrb[0].mxu0
        %v1616 = vadd.f32 0.0, %v1615
        %v1617 = vpop.f32.mrb[0].mxu0
        %1618 = vmatprep.mubr.bf16.mxu0 0
        %1619 = vmatmul.mubr.bf16.gmra.mrb[0].mxu0 %v1186
        %v1620 = vpop.f32.mrb[0].mxu0
        %v1621 = vadd.f32 0.0, %v1620
        %v1622 = vpop.f32.mrb[0].mxu0
        %v1623 = vpop.f32.mrb[0].mxu0
        %v1624 = vadd.f32 0.0, %v1623
        %v1625 = vpop.f32.mrb[0].mxu0
        %1626 = vmatprep.mubr.bf16.mxu0 0
        %1627 = vmatmul.mubr.bf16.gmra.mrb[0].mxu0 %v1187
        %v1628 = vpop.f32.mrb[0].mxu0
        %v1629 = vadd.f32 0.0, %v1628
        %v1630 = vpop.f32.mrb[0].mxu0
        %v1631 = vpop.f32.mrb[0].mxu0
        %v1632 = vadd.f32 0.0, %v1631
        %v1633 = vpop.f32.mrb[0].mxu0
        %1634 = vmatprep.mubr.bf16.mxu0 0
        %1635 = vmatmul.mubr.bf16.gmra.mrb[0].mxu0 %v1188
        %v1636 = vpop.f32.mrb[0].mxu0
        %v1637 = vadd.f32 0.0, %v1636
        %v1638 = vpop.f32.mrb[0].mxu0
        %v1639 = vpop.f32.mrb[0].mxu0
        %v1640 = vadd.f32 0.0, %v1639
        %v1641 = vpop.f32.mrb[0].mxu0
        %1642 = vmatprep.mubr.bf16.mxu0 0
        %1643 = vmatmul.mubr.bf16.gmra.mrb[0].mxu0 %v1189
        %v1644 = vpop.f32.mrb[0].mxu0
        %v1645 = vadd.f32 0.0, %v1644
        %v1646 = vpop.f32.mrb[0].mxu0
        %v1647 = vpop.f32.mrb[0].mxu0
        %v1648 = vadd.f32 0.0, %v1647
        %v1649 = vpop.f32.mrb[0].mxu0
        %1650 = vmatprep.mubr.bf16.mxu0 0
        %1651 = vmatmul.mubr.bf16.gmra.mrb[0].mxu0 %v1190
        %v1652 = vpop.f32.mrb[0].mxu0
        %v1653 = vadd.f32 0.0, %v1652
        %v1654 = vpop.f32.mrb[0].mxu0
        %v1655 = vpop.f32.mrb[0].mxu0
        %v1656 = vadd.f32 0.0, %v1655
        %v1657 = vpop.f32.mrb[0].mxu0
        %1658 = vmatprep.mubr.bf16.mxu0 0
        %1659 = vmatmul.mubr.bf16.gmra.mrb[0].mxu0 %v1191
        %v1660 = vpop.f32.mrb[0].mxu0
        %v1661 = vadd.f32 0.0, %v1660
        %v1662 = vpop.f32.mrb[0].mxu0
        %v1663 = vpop.f32.mrb[0].mxu0
        %v1664 = vadd.f32 0.0, %v1663
        %v1665 = vpop.f32.mrb[0].mxu0
        %1666 = vmatprep.mubr.bf16.mxu0 0
        %1667 = vmatmul.mubr.bf16.gmra.mrb[0].mxu0 %v1192
        %v1668 = vpop.f32.mrb[0].mxu0
        %v1669 = vadd.f32 0.0, %v1668
        %v1670 = vpop.f32.mrb[0].mxu0
        %v1671 = vpop.f32.mrb[0].mxu0
        %v1672 = vadd.f32 0.0, %v1671
        %v1673 = vpop.f32.mrb[0].mxu0
        %1674 = vmatprep.mubr.bf16.mxu0 0
        %1675 = vmatmul.mubr.bf16.gmra.mrb[0].mxu0 %v1193
        %v1676 = vpop.f32.mrb[0].mxu0
        %v1677 = vadd.f32 0.0, %v1676
        %v1678 = vpop.f32.mrb[0].mxu0
        %v1679 = vpop.f32.mrb[0].mxu0
        %v1680 = vadd.f32 0.0, %v1679
        %v1681 = vpop.f32.mrb[0].mxu0
        %1682 = vmatprep.mubr.bf16.mxu0 0
        %1683 = vmatmul.mubr.bf16.gmra.mrb[0].mxu0 %v1194
        %v1684 = vpop.f32.mrb[0].mxu0
        %v1685 = vadd.f32 0.0, %v1684
        %v1686 = vpop.f32.mrb[0].mxu0
        %v1687 = vpop.f32.mrb[0].mxu0
        %v1688 = vadd.f32 0.0, %v1687
        %v1689 = vpop.f32.mrb[0].mxu0
        %1690 = vmatprep.mubr.bf16.mxu0 0
        %1691 = vmatmul.mubr.bf16.gmra.mrb[0].mxu0 %v1195
        %v1692 = vpop.f32.mrb[0].mxu0
        %v1693 = vadd.f32 0.0, %v1692
        %v1694 = vpop.f32.mrb[0].mxu0
        %v1695 = vpop.f32.mrb[0].mxu0
        %v1696 = vadd.f32 0.0, %v1695
        %v1697 = vpop.f32.mrb[0].mxu0
        %1698 = vmatprep.mubr.bf16.mxu0 0
        %1699 = vmatmul.mubr.bf16.gmra.mrb[0].mxu0 %v1196
        %v1700 = vpop.f32.mrb[0].mxu0
        %v1701 = vadd.f32 0.0, %v1700
        %v1702 = vpop.f32.mrb[0].mxu0
        %v1703 = vpop.f32.mrb[0].mxu0
        %v1704 = vadd.f32 0.0, %v1703
        %v1705 = vpop.f32.mrb[0].mxu0
        %1706 = vmatprep.mubr.bf16.mxu0 0
        %1707 = vmatmul.mubr.bf16.gmra.mrb[0].mxu0 %v1197
        %v1708 = vpop.f32.mrb[0].mxu0
        %v1709 = vadd.f32 0.0, %v1708
        %v1710 = vpop.f32.mrb[0].mxu0
        %v1711 = vpop.f32.mrb[0].mxu0
        %v1712 = vadd.f32 0.0, %v1711
        %v1713 = vpop.f32.mrb[0].mxu0
        %1714 = vmatprep.mubr.bf16.mxu0 0
        %1715 = vmatmul.mubr.bf16.gmra.mrb[0].mxu0 %v1198
        %v1716 = vpop.f32.mrb[0].mxu0
        %v1717 = vadd.f32 0.0, %v1716
        %v1718 = vpop.f32.mrb[0].mxu0
        %v1719 = vpop.f32.mrb[0].mxu0
        %v1720 = vadd.f32 0.0, %v1719
        %v1721 = vpop.f32.mrb[0].mxu0
        %1722 = vmatprep.mubr.bf16.mxu0 0
        %1723 = vmatmul.mubr.bf16.gmra.mrb[0].mxu0 %v1199
        %v1724 = vpop.f32.mrb[0].mxu0
        %v1725 = vadd.f32 0.0, %v1724
        %v1726 = vpop.f32.mrb[0].mxu0
        %v1727 = vpop.f32.mrb[0].mxu0
        %v1728 = vadd.f32 0.0, %v1727
        %v1729 = vpop.f32.mrb[0].mxu0
        %1730 = vmatprep.mubr.bf16.mxu0 0
        %1731 = vmatmul.mubr.bf16.gmra.mrb[0].mxu0 %v1200
        %v1732 = vpop.f32.mrb[0].mxu0
        %v1733 = vadd.f32 0.0, %v1732
        %v1734 = vpop.f32.mrb[0].mxu0
        %v1735 = vpop.f32.mrb[0].mxu0
        %v1736 = vadd.f32 0.0, %v1735
        %v1737 = vpop.f32.mrb[0].mxu0
        %1738 = vmatprep.mubr.bf16.mxu0 0
        %1739 = vmatmul.mubr.bf16.gmra.mrb[0].mxu0 %v1201
        %v1740 = vpop.f32.mrb[0].mxu0
        %v1741 = vadd.f32 0.0, %v1740
        %v1742 = vpop.f32.mrb[0].mxu0
        %v1743 = vpop.f32.mrb[0].mxu0
        %v1744 = vadd.f32 0.0, %v1743
        %v1745 = vpop.f32.mrb[0].mxu0
        %1746 = vmatprep.mubr.bf16.mxu0 0
        %1747 = vmatmul.mubr.bf16.gmra.mrb[0].mxu0 %v1202
        %v1748 = vpop.f32.mrb[0].mxu0
        %v1749 = vadd.f32 0.0, %v1748
        %v1750 = vpop.f32.mrb[0].mxu0
        %v1751 = vpop.f32.mrb[0].mxu0
        %v1752 = vadd.f32 0.0, %v1751
        %v1753 = vpop.f32.mrb[0].mxu0
        %1754 = vmatprep.mubr.bf16.mxu0 0
        %1755 = vmatmul.mubr.bf16.gmra.mrb[0].mxu0 %v1203
        %v1756 = vpop.f32.mrb[0].mxu0
        %v1757 = vadd.f32 0.0, %v1756
        %v1758 = vpop.f32.mrb[0].mxu0
        %v1759 = vpop.f32.mrb[0].mxu0
        %v1760 = vadd.f32 0.0, %v1759
        %v1761 = vpop.f32.mrb[0].mxu0
        %1762 = vmatprep.mubr.bf16.mxu0 0
        %1763 = vmatmul.mubr.bf16.gmra.mrb[0].mxu0 %v1204
        %v1764 = vpop.f32.mrb[0].mxu0
        %v1765 = vadd.f32 0.0, %v1764
        %v1766 = vpop.f32.mrb[0].mxu0
        %v1767 = vpop.f32.mrb[0].mxu0
        %v1768 = vadd.f32 0.0, %v1767
        %v1769 = vpop.f32.mrb[0].mxu0
        %1770 = vmatprep.mubr.bf16.mxu0 0
        %1771 = vmatmul.mubr.bf16.gmra.mrb[0].mxu0 %v1205
        %v1772 = vpop.f32.mrb[0].mxu0
        %v1773 = vadd.f32 0.0, %v1772
        %v1774 = vpop.f32.mrb[0].mxu0
        %v1775 = vpop.f32.mrb[0].mxu0
        %v1776 = vadd.f32 0.0, %v1775
        %v1777 = vpop.f32.mrb[0].mxu0
        %1778 = vmatprep.mubr.bf16.mxu0 0
        %1779 = vmatmul.mubr.bf16.gmra.mrb[0].mxu0 %v1206
        %v1780 = vpop.f32.mrb[0].mxu0
        %v1781 = vadd.f32 0.0, %v1780
        %v1782 = vpop.f32.mrb[0].mxu0
        %v1783 = vpop.f32.mrb[0].mxu0
        %v1784 = vadd.f32 0.0, %v1783
        %v1785 = vpop.f32.mrb[0].mxu0
        %1786 = vmatprep.mubr.bf16.mxu0 0
        %1787 = vmatmul.mubr.bf16.gmra.mrb[0].mxu0 %v1207
        %v1788 = vpop.f32.mrb[0].mxu0
        %v1789 = vadd.f32 0.0, %v1788
        %v1790 = vpop.f32.mrb[0].mxu0
        %v1791 = vpop.f32.mrb[0].mxu0
        %v1792 = vadd.f32 0.0, %v1791
        %v1793 = vpop.f32.mrb[0].mxu0
        %1794 = vmatprep.mubr.bf16.mxu0 0
        %1795 = vmatmul.mubr.bf16.gmra.mrb[0].mxu0 %v1208
        %v1796 = vpop.f32.mrb[0].mxu0
        %v1797 = vadd.f32 0.0, %v1796
        %v1798 = vpop.f32.mrb[0].mxu0
        %v1799 = vpop.f32.mrb[0].mxu0
        %v1800 = vadd.f32 0.0, %v1799
        %v1801 = vpop.f32.mrb[0].mxu0
        %1802 = vmatprep.mubr.bf16.mxu0 0
        %1803 = vmatmul.mubr.bf16.gmra.mrb[0].mxu0 %v1209
        %v1804 = vpop.f32.mrb[0].mxu0
        %v1805 = vadd.f32 0.0, %v1804
        %v1806 = vpop.f32.mrb[0].mxu0
        %v1807 = vpop.f32.mrb[0].mxu0
        %v1808 = vadd.f32 0.0, %v1807
        %v1809 = vpop.f32.mrb[0].mxu0
        %1810 = vmatprep.mubr.bf16.mxu0 0
        %1811 = vmatmul.mubr.bf16.gmra.mrb[0].mxu0 %v1210
        %v1812 = vpop.f32.mrb[0].mxu0
        %v1813 = vadd.f32 0.0, %v1812
        %v1814 = vpop.f32.mrb[0].mxu0
        %v1815 = vpop.f32.mrb[0].mxu0
        %v1816 = vadd.f32 0.0, %v1815
        %v1817 = vpop.f32.mrb[0].mxu0
        %1818 = vmatprep.mubr.bf16.mxu0 0
        %1819 = vmatmul.mubr.bf16.gmra.mrb[0].mxu0 %v1211
        %v1820 = vpop.f32.mrb[0].mxu0
        %v1821 = vadd.f32 0.0, %v1820
        %v1822 = vpop.f32.mrb[0].mxu0
        %v1823 = vpop.f32.mrb[0].mxu0
        %v1824 = vadd.f32 0.0, %v1823
        %v1825 = vpop.f32.mrb[0].mxu0
        %1826 = vmatprep.mubr.bf16.mxu0 0
        %1827 = vmatmul.mubr.bf16.gmra.mrb[0].mxu0 %v1212
        %v1828 = vpop.f32.mrb[0].mxu0
        %v1829 = vadd.f32 0.0, %v1828
        %v1830 = vpop.f32.mrb[0].mxu0
        %v1831 = vpop.f32.mrb[0].mxu0
        %v1832 = vadd.f32 0.0, %v1831
        %v1833 = vpop.f32.mrb[0].mxu0
        %1834 = vmatprep.mubr.bf16.mxu0 0
        %1835 = vmatmul.mubr.bf16.gmra.mrb[0].mxu0 %v1213
        %v1836 = vpop.f32.mrb[0].mxu0
        %v1837 = vadd.f32 0.0, %v1836
        %v1838 = vpop.f32.mrb[0].mxu0
        %v1839 = vpop.f32.mrb[0].mxu0
        %v1840 = vadd.f32 0.0, %v1839
        %v1841 = vpop.f32.mrb[0].mxu0
        %1842 = vmatprep.mubr.bf16.mxu0 0
        %1843 = vmatmul.mubr.bf16.gmra.mrb[0].mxu0 %v1214
        %v1844 = vpop.f32.mrb[0].mxu0
        %v1845 = vadd.f32 0.0, %v1844
        %v1846 = vpop.f32.mrb[0].mxu0
        %v1847 = vpop.f32.mrb[0].mxu0
        %v1848 = vadd.f32 0.0, %v1847
        %v1849 = vpop.f32.mrb[0].mxu0
        %1850 = vmatprep.mubr.bf16.mxu0 0
        %1851 = vmatmul.mubr.bf16.gmra.mrb[0].mxu0 %v1215
        %v1852 = vpop.f32.mrb[0].mxu0
        %v1853 = vadd.f32 0.0, %v1852
        %v1854 = vpop.f32.mrb[0].mxu0
        %v1855 = vpop.f32.mrb[0].mxu0
        %v1856 = vadd.f32 0.0, %v1855
        %v1857 = vpop.f32.mrb[0].mxu0
        %1858 = vmatprep.mubr.bf16.mxu0 0
        %1859 = vmatmul.mubr.bf16.gmra.mrb[0].mxu0 %v1216
        %v1860 = vpop.f32.mrb[0].mxu0
        %v1861 = vadd.f32 0.0, %v1860
        %v1862 = vpop.f32.mrb[0].mxu0
        %v1863 = vpop.f32.mrb[0].mxu0
        %v1864 = vadd.f32 0.0, %v1863
        %v1865 = vpop.f32.mrb[0].mxu0
        %1866 = vmatprep.mubr.bf16.mxu0 0
        %1867 = vmatmul.mubr.bf16.gmra.mrb[0].mxu0 %v1217
        %v1868 = vpop.f32.mrb[0].mxu0
        %v1869 = vadd.f32 0.0, %v1868
        %v1870 = vpop.f32.mrb[0].mxu0
        %v1871 = vpop.f32.mrb[0].mxu0
        %v1872 = vadd.f32 0.0, %v1871
        %v1873 = vpop.f32.mrb[0].mxu0
        %1874 = vdwg.mxu0
        %v1875 = vlaneseq
        %v1876 = vshrl.u32 %v1875, 7
        %v1877 = vadd.s32 %v1876, 8
        %v1878 = vadd.s32 %v1876, 16
        %v1879 = vadd.s32 %v1876, 24
        %v1880 = vld [vmem:[%s408] sm:$0xff]
        %v1881 = vlaneseq
        %v1882 = vshrl.u32 %v1881, 7
        %v1883 = vsub.s32 0, %v1882
        %v1884 = vrot.slane %v1880, %v1883
        %v1885 = vlaneseq
        %v1886 = vshrl.u32 %v1885, 7
        %v1887 = vsub.s32 1, %v1886
        %v1888 = vrot.slane %v1880, %v1887
        %v1889 = vlaneseq
        %v1890 = vshrl.u32 %v1889, 7
        %v1891 = vsub.s32 2, %v1890
        %v1892 = vrot.slane %v1880, %v1891
        %v1893 = vlaneseq
        %v1894 = vshrl.u32 %v1893, 7
        %v1895 = vsub.s32 3, %v1894
        %v1896 = vrot.slane %v1880, %v1895
        %v1897 = vlaneseq
        %v1898 = vshrl.u32 %v1897, 7
        %v1899 = vsub.s32 4, %v1898
        %v1900 = vrot.slane %v1880, %v1899
        %v1901 = vlaneseq
        %v1902 = vshrl.u32 %v1901, 7
        %v1903 = vsub.s32 5, %v1902
        %v1904 = vrot.slane %v1880, %v1903
        %v1905 = vlaneseq
        %v1906 = vshrl.u32 %v1905, 7
        %v1907 = vsub.s32 6, %v1906
        %v1908 = vrot.slane %v1880, %v1907
        %v1909 = vlaneseq
        %v1910 = vshrl.u32 %v1909, 7
        %v1911 = vsub.s32 7, %v1910
        %v1912 = vrot.slane %v1880, %v1911
        %vm1913 = vcmp.eq.s32.totalorder %v1884, %v1876
        %vm1914 = vcmp.eq.s32.totalorder %v1888, %v1876
        %vm1915 = vcmp.eq.s32.totalorder %v1892, %v1876
        %vm1916 = vcmp.eq.s32.totalorder %v1896, %v1876
        %vm1917 = vcmp.eq.s32.totalorder %v1900, %v1876
        %vm1918 = vcmp.eq.s32.totalorder %v1904, %v1876
        %vm1919 = vcmp.eq.s32.totalorder %v1908, %v1876
        %vm1920 = vcmp.eq.s32.totalorder %v1912, %v1876
        %vm1921 = vcmp.eq.s32.totalorder %v1884, %v1877
        %vm1922 = vcmp.eq.s32.totalorder %v1888, %v1877
        %vm1923 = vcmp.eq.s32.totalorder %v1892, %v1877
        %vm1924 = vcmp.eq.s32.totalorder %v1896, %v1877
        %vm1925 = vcmp.eq.s32.totalorder %v1900, %v1877
        %vm1926 = vcmp.eq.s32.totalorder %v1904, %v1877
        %vm1927 = vcmp.eq.s32.totalorder %v1908, %v1877
        %vm1928 = vcmp.eq.s32.totalorder %v1912, %v1877
        %vm1929 = vcmp.eq.s32.totalorder %v1884, %v1878
        %vm1930 = vcmp.eq.s32.totalorder %v1888, %v1878
        %vm1931 = vcmp.eq.s32.totalorder %v1892, %v1878
        %vm1932 = vcmp.eq.s32.totalorder %v1896, %v1878
        %vm1933 = vcmp.eq.s32.totalorder %v1900, %v1878
        %vm1934 = vcmp.eq.s32.totalorder %v1904, %v1878
        %vm1935 = vcmp.eq.s32.totalorder %v1908, %v1878
        %vm1936 = vcmp.eq.s32.totalorder %v1912, %v1878
        %vm1937 = vcmp.eq.s32.totalorder %v1884, %v1879
        %vm1938 = vcmp.eq.s32.totalorder %v1888, %v1879
        %vm1939 = vcmp.eq.s32.totalorder %v1892, %v1879
        %vm1940 = vcmp.eq.s32.totalorder %v1896, %v1879
        %vm1941 = vcmp.eq.s32.totalorder %v1900, %v1879
        %vm1942 = vcmp.eq.s32.totalorder %v1904, %v1879
        %vm1943 = vcmp.eq.s32.totalorder %v1908, %v1879
        %vm1944 = vcmp.eq.s32.totalorder %v1912, %v1879
        %v1945 = vsel %vm1913, 1, 0
        %v1946 = vsel %vm1914, 1, 0
        %v1947 = vsel %vm1915, 1, 0
        %v1948 = vsel %vm1916, 1, 0
        %v1949 = vsel %vm1917, 1, 0
        %v1950 = vsel %vm1918, 1, 0
        %v1951 = vsel %vm1919, 1, 0
        %v1952 = vsel %vm1920, 1, 0
        %v1953 = vsel %vm1921, 1, 0
        %v1954 = vsel %vm1922, 1, 0
        %v1955 = vsel %vm1923, 1, 0
        %v1956 = vsel %vm1924, 1, 0
        %v1957 = vsel %vm1925, 1, 0
        %v1958 = vsel %vm1926, 1, 0
        %v1959 = vsel %vm1927, 1, 0
        %v1960 = vsel %vm1928, 1, 0
        %v1961 = vsel %vm1929, 1, 0
        %v1962 = vsel %vm1930, 1, 0
        %v1963 = vsel %vm1931, 1, 0
        %v1964 = vsel %vm1932, 1, 0
        %v1965 = vsel %vm1933, 1, 0
        %v1966 = vsel %vm1934, 1, 0
        %v1967 = vsel %vm1935, 1, 0
        %v1968 = vsel %vm1936, 1, 0
        %v1969 = vsel %vm1937, 1, 0
        %v1970 = vsel %vm1938, 1, 0
        %v1971 = vsel %vm1939, 1, 0
        %v1972 = vsel %vm1940, 1, 0
        %v1973 = vsel %vm1941, 1, 0
        %v1974 = vsel %vm1942, 1, 0
        %v1975 = vsel %vm1943, 1, 0
        %v1976 = vsel %vm1944, 1, 0
        %v1977 = vcvt.s32.f32 %v1945
        %v1978 = vcvt.s32.f32 %v1946
        %v1979 = vcvt.s32.f32 %v1947
        %v1980 = vcvt.s32.f32 %v1948
        %v1981 = vcvt.s32.f32 %v1949
        %v1982 = vcvt.s32.f32 %v1950
        %v1983 = vcvt.s32.f32 %v1951
        %v1984 = vcvt.s32.f32 %v1952
        %v1985 = vcvt.s32.f32 %v1953
        %v1986 = vcvt.s32.f32 %v1954
        %v1987 = vcvt.s32.f32 %v1955
        %v1988 = vcvt.s32.f32 %v1956
        %v1989 = vcvt.s32.f32 %v1957
        %v1990 = vcvt.s32.f32 %v1958
        %v1991 = vcvt.s32.f32 %v1959
        %v1992 = vcvt.s32.f32 %v1960
        %v1993 = vcvt.s32.f32 %v1961
        %v1994 = vcvt.s32.f32 %v1962
        %v1995 = vcvt.s32.f32 %v1963
        %v1996 = vcvt.s32.f32 %v1964
        %v1997 = vcvt.s32.f32 %v1965
        %v1998 = vcvt.s32.f32 %v1966
        %v1999 = vcvt.s32.f32 %v1967
        %v2000 = vcvt.s32.f32 %v1968
        %v2001 = vcvt.s32.f32 %v1969
        %v2002 = vcvt.s32.f32 %v1970
        %v2003 = vcvt.s32.f32 %v1971
        %v2004 = vcvt.s32.f32 %v1972
        %v2005 = vcvt.s32.f32 %v1973
        %v2006 = vcvt.s32.f32 %v1974
        %v2007 = vcvt.s32.f32 %v1975
        %v2008 = vcvt.s32.f32 %v1976
        %v2009 = vpack.c.bf16 %v1985, %v1977
        %v2010 = vpack.c.bf16 %v1986, %v1978
        %v2011 = vpack.c.bf16 %v1987, %v1979
        %v2012 = vpack.c.bf16 %v1988, %v1980
        %v2013 = vpack.c.bf16 %v1989, %v1981
        %v2014 = vpack.c.bf16 %v1990, %v1982
        %v2015 = vpack.c.bf16 %v1991, %v1983
        %v2016 = vpack.c.bf16 %v1992, %v1984
        %v2017 = vpack.c.bf16 %v2001, %v1993
        %v2018 = vpack.c.bf16 %v2002, %v1994
        %v2019 = vpack.c.bf16 %v2003, %v1995
        %v2020 = vpack.c.bf16 %v2004, %v1996
        %v2021 = vpack.c.bf16 %v2005, %v1997
        %v2022 = vpack.c.bf16 %v2006, %v1998
        %v2023 = vpack.c.bf16 %v2007, %v1999
        %v2024 = vpack.c.bf16 %v2008, %v2000
        %v2025 = vld [vmem:[%s476] sm:$0xff]
        %v2026 = vld [vmem:[%s476 + $0x8] sm:$0xff]
        %v2027 = vld [vmem:[%s476 + $0x10] sm:$0xff]
        %v2028 = vld [vmem:[%s476 + $0x18] sm:$0xff]
        %v2029 = vpack.c.bf16 %v1368, %v1365
        %v2030 = vpack.c.bf16 %v1376, %v1373
        %v2031 = vpack.c.bf16 %v1384, %v1381
        %v2032 = vpack.c.bf16 %v1392, %v1389
        %v2033 = vpack.c.bf16 %v1400, %v1397
        %v2034 = vpack.c.bf16 %v1408, %v1405
        %v2035 = vpack.c.bf16 %v1416, %v1413
        %v2036 = vpack.c.bf16 %v1424, %v1421
        %v2037 = vpack.c.bf16 %v1432, %v1429
        %v2038 = vpack.c.bf16 %v1440, %v1437
        %v2039 = vpack.c.bf16 %v1448, %v1445
        %v2040 = vpack.c.bf16 %v1456, %v1453
        %v2041 = vpack.c.bf16 %v1464, %v1461
        %v2042 = vpack.c.bf16 %v1472, %v1469
        %v2043 = vpack.c.bf16 %v1480, %v1477
        %v2044 = vpack.c.bf16 %v1488, %v1485
        %v2045 = vpack.c.bf16 %v1496, %v1493
        %v2046 = vpack.c.bf16 %v1504, %v1501
        %v2047 = vpack.c.bf16 %v1512, %v1509
        %v2048 = vpack.c.bf16 %v1520, %v1517
        %v2049 = vpack.c.bf16 %v1528, %v1525
        %v2050 = vpack.c.bf16 %v1536, %v1533
        %v2051 = vpack.c.bf16 %v1544, %v1541
        %v2052 = vpack.c.bf16 %v1552, %v1549
        %v2053 = vpack.c.bf16 %v1560, %v1557
        %v2054 = vpack.c.bf16 %v1568, %v1565
        %v2055 = vpack.c.bf16 %v1576, %v1573
        %v2056 = vpack.c.bf16 %v1584, %v1581
        %v2057 = vpack.c.bf16 %v1592, %v1589
        %v2058 = vpack.c.bf16 %v1600, %v1597
        %v2059 = vpack.c.bf16 %v1608, %v1605
        %v2060 = vpack.c.bf16 %v1616, %v1613
        %v2061 = vpack.c.bf16 %v1624, %v1621
        %v2062 = vpack.c.bf16 %v1632, %v1629
        %v2063 = vpack.c.bf16 %v1640, %v1637
        %v2064 = vpack.c.bf16 %v1648, %v1645
        %v2065 = vpack.c.bf16 %v1656, %v1653
        %v2066 = vpack.c.bf16 %v1664, %v1661
        %v2067 = vpack.c.bf16 %v1672, %v1669
        %v2068 = vpack.c.bf16 %v1680, %v1677
        %v2069 = vpack.c.bf16 %v1688, %v1685
        %v2070 = vpack.c.bf16 %v1696, %v1693
        %v2071 = vpack.c.bf16 %v1704, %v1701
        %v2072 = vpack.c.bf16 %v1712, %v1709
        %v2073 = vpack.c.bf16 %v1720, %v1717
        %v2074 = vpack.c.bf16 %v1728, %v1725
        %v2075 = vpack.c.bf16 %v1736, %v1733
        %v2076 = vpack.c.bf16 %v1744, %v1741
        %v2077 = vpack.c.bf16 %v1752, %v1749
        %v2078 = vpack.c.bf16 %v1760, %v1757
        %v2079 = vpack.c.bf16 %v1768, %v1765
        %v2080 = vpack.c.bf16 %v1776, %v1773
        %v2081 = vpack.c.bf16 %v1784, %v1781
        %v2082 = vpack.c.bf16 %v1792, %v1789
        %v2083 = vpack.c.bf16 %v1800, %v1797
        %v2084 = vpack.c.bf16 %v1808, %v1805
        %v2085 = vpack.c.bf16 %v1816, %v1813
        %v2086 = vpack.c.bf16 %v1824, %v1821
        %v2087 = vpack.c.bf16 %v1832, %v1829
        %v2088 = vpack.c.bf16 %v1840, %v1837
        %v2089 = vpack.c.bf16 %v1848, %v1845
        %v2090 = vpack.c.bf16 %v1856, %v1853
        %v2091 = vpack.c.bf16 %v1864, %v1861
        %v2092 = vpack.c.bf16 %v1872, %v1869
        %2093 = vmatprep.subr.bf16.mxu0 0
        %2094 = vmatpush1.bf16.msra.mxu0 %v2029
        %2095 = vmatprep.subr.bf16.mxu0 0
        %2096 = vmatpush1.bf16.msra.mxu0 %v2030
        %2097 = vmatprep.subr.bf16.mxu0 0
        %2098 = vmatpush1.bf16.msra.mxu0 %v2031
        %2099 = vmatprep.subr.bf16.mxu0 0
        %2100 = vmatpush1.bf16.msra.mxu0 %v2032
        %2101 = vmatprep.subr.bf16.mxu0 0
        %2102 = vmatpush1.bf16.msra.mxu0 %v2033
        %2103 = vmatprep.subr.bf16.mxu0 0
        %2104 = vmatpush1.bf16.msra.mxu0 %v2034
        %2105 = vmatprep.subr.bf16.mxu0 0
        %2106 = vmatpush1.bf16.msra.mxu0 %v2035
        %2107 = vmatprep.subr.bf16.mxu0 0
        %2108 = vmatpush1.bf16.msra.mxu0 %v2036
        %2109 = vmatprep.subr.bf16.mxu0 0
        %2110 = vmatpush1.bf16.msra.mxu0 %v2037
        %2111 = vmatprep.subr.bf16.mxu0 0
        %2112 = vmatpush1.bf16.msra.mxu0 %v2038
        %2113 = vmatprep.subr.bf16.mxu0 0
        %2114 = vmatpush1.bf16.msra.mxu0 %v2039
        %2115 = vmatprep.subr.bf16.mxu0 0
        %2116 = vmatpush1.bf16.msra.mxu0 %v2040
        %2117 = vmatprep.subr.bf16.mxu0 0
        %2118 = vmatpush1.bf16.msra.mxu0 %v2041
        %2119 = vmatprep.subr.bf16.mxu0 0
        %2120 = vmatpush1.bf16.msra.mxu0 %v2042
        %2121 = vmatprep.subr.bf16.mxu0 0
        %2122 = vmatpush1.bf16.msra.mxu0 %v2043
        %2123 = vmatprep.subr.bf16.mxu0 0
        %2124 = vmatpush1.bf16.msra.mxu0 %v2044
        %2125 = vmatprep.mubr.bf16.mxu0 %v2010
        %2126 = vmatmul.mubr.bf16.gmra.mrb[0].mxu0 %v2009
        %v2127 = vpop.f32.mrb[0].mxu0
        %v2128 = vadd.f32 0.0, %v2127
        %v2129 = vpop.f32.mrb[0].mxu0
        %v2130 = vpop.f32.mrb[0].mxu0
        %v2131 = vadd.f32 0.0, %v2130
        %v2132 = vpop.f32.mrb[0].mxu0
        %2133 = vmatprep.mubr.bf16.mxu0 %v2018
        %2134 = vmatmul.mubr.bf16.gmra.mrb[0].mxu0 %v2017
        %v2135 = vpop.f32.mrb[0].mxu0
        %v2136 = vadd.f32 0.0, %v2135
        %v2137 = vpop.f32.mrb[0].mxu0
        %v2138 = vpop.f32.mrb[0].mxu0
        %v2139 = vadd.f32 0.0, %v2138
        %v2140 = vpop.f32.mrb[0].mxu0
        %2141 = vdwg.mxu0
        %2142 = vmatprep.subr.bf16.mxu0 0
        %2143 = vmatpush1.bf16.msra.mxu0 %v2045
        %2144 = vmatprep.subr.bf16.mxu0 0
        %2145 = vmatpush1.bf16.msra.mxu0 %v2046
        %2146 = vmatprep.subr.bf16.mxu0 0
        %2147 = vmatpush1.bf16.msra.mxu0 %v2047
        %2148 = vmatprep.subr.bf16.mxu0 0
        %2149 = vmatpush1.bf16.msra.mxu0 %v2048
        %2150 = vmatprep.subr.bf16.mxu0 0
        %2151 = vmatpush1.bf16.msra.mxu0 %v2049
        %2152 = vmatprep.subr.bf16.mxu0 0
        %2153 = vmatpush1.bf16.msra.mxu0 %v2050
        %2154 = vmatprep.subr.bf16.mxu0 0
        %2155 = vmatpush1.bf16.msra.mxu0 %v2051
        %2156 = vmatprep.subr.bf16.mxu0 0
        %2157 = vmatpush1.bf16.msra.mxu0 %v2052
        %2158 = vmatprep.subr.bf16.mxu0 0
        %2159 = vmatpush1.bf16.msra.mxu0 %v2053
        %2160 = vmatprep.subr.bf16.mxu0 0
        %2161 = vmatpush1.bf16.msra.mxu0 %v2054
        %2162 = vmatprep.subr.bf16.mxu0 0
        %2163 = vmatpush1.bf16.msra.mxu0 %v2055
        %2164 = vmatprep.subr.bf16.mxu0 0
        %2165 = vmatpush1.bf16.msra.mxu0 %v2056
        %2166 = vmatprep.subr.bf16.mxu0 0
        %2167 = vmatpush1.bf16.msra.mxu0 %v2057
        %2168 = vmatprep.subr.bf16.mxu0 0
        %2169 = vmatpush1.bf16.msra.mxu0 %v2058
        %2170 = vmatprep.subr.bf16.mxu0 0
        %2171 = vmatpush1.bf16.msra.mxu0 %v2059
        %2172 = vmatprep.subr.bf16.mxu0 0
        %2173 = vmatpush1.bf16.msra.mxu0 %v2060
        %2174 = vmatprep.mubr.bf16.mxu0 %v2012
        %2175 = vmatmul.mubr.bf16.gmra.mrb[0].mxu0 %v2011
        %v2176 = vpop.f32.mrb[0].mxu0
        %v2177 = vadd.f32 %v2128, %v2176
        %v2178 = vpop.f32.mrb[0].mxu0
        %v2179 = vpop.f32.mrb[0].mxu0
        %v2180 = vadd.f32 %v2131, %v2179
        %v2181 = vpop.f32.mrb[0].mxu0
        %2182 = vmatprep.mubr.bf16.mxu0 %v2020
        %2183 = vmatmul.mubr.bf16.gmra.mrb[0].mxu0 %v2019
        %v2184 = vpop.f32.mrb[0].mxu0
        %v2185 = vadd.f32 %v2136, %v2184
        %v2186 = vpop.f32.mrb[0].mxu0
        %v2187 = vpop.f32.mrb[0].mxu0
        %v2188 = vadd.f32 %v2139, %v2187
        %v2189 = vpop.f32.mrb[0].mxu0
        %2190 = vdwg.mxu0
        %2191 = vmatprep.subr.bf16.mxu0 0
        %2192 = vmatpush1.bf16.msra.mxu0 %v2061
        %2193 = vmatprep.subr.bf16.mxu0 0
        %2194 = vmatpush1.bf16.msra.mxu0 %v2062
        %2195 = vmatprep.subr.bf16.mxu0 0
        %2196 = vmatpush1.bf16.msra.mxu0 %v2063
        %2197 = vmatprep.subr.bf16.mxu0 0
        %2198 = vmatpush1.bf16.msra.mxu0 %v2064
        %2199 = vmatprep.subr.bf16.mxu0 0
        %2200 = vmatpush1.bf16.msra.mxu0 %v2065
        %2201 = vmatprep.subr.bf16.mxu0 0
        %2202 = vmatpush1.bf16.msra.mxu0 %v2066
        %2203 = vmatprep.subr.bf16.mxu0 0
        %2204 = vmatpush1.bf16.msra.mxu0 %v2067
        %2205 = vmatprep.subr.bf16.mxu0 0
        %2206 = vmatpush1.bf16.msra.mxu0 %v2068
        %2207 = vmatprep.subr.bf16.mxu0 0
        %2208 = vmatpush1.bf16.msra.mxu0 %v2069
        %2209 = vmatprep.subr.bf16.mxu0 0
        %2210 = vmatpush1.bf16.msra.mxu0 %v2070
        %2211 = vmatprep.subr.bf16.mxu0 0
        %2212 = vmatpush1.bf16.msra.mxu0 %v2071
        %2213 = vmatprep.subr.bf16.mxu0 0
        %2214 = vmatpush1.bf16.msra.mxu0 %v2072
        %2215 = vmatprep.subr.bf16.mxu0 0
        %2216 = vmatpush1.bf16.msra.mxu0 %v2073
        %2217 = vmatprep.subr.bf16.mxu0 0
        %2218 = vmatpush1.bf16.msra.mxu0 %v2074
        %2219 = vmatprep.subr.bf16.mxu0 0
        %2220 = vmatpush1.bf16.msra.mxu0 %v2075
        %2221 = vmatprep.subr.bf16.mxu0 0
        %2222 = vmatpush1.bf16.msra.mxu0 %v2076
        %2223 = vmatprep.mubr.bf16.mxu0 %v2014
        %2224 = vmatmul.mubr.bf16.gmra.mrb[0].mxu0 %v2013
        %v2225 = vpop.f32.mrb[0].mxu0
        %v2226 = vadd.f32 %v2177, %v2225
        %v2227 = vpop.f32.mrb[0].mxu0
        %v2228 = vpop.f32.mrb[0].mxu0
        %v2229 = vadd.f32 %v2180, %v2228
        %v2230 = vpop.f32.mrb[0].mxu0
        %2231 = vmatprep.mubr.bf16.mxu0 %v2022
        %2232 = vmatmul.mubr.bf16.gmra.mrb[0].mxu0 %v2021
        %v2233 = vpop.f32.mrb[0].mxu0
        %v2234 = vadd.f32 %v2185, %v2233
        %v2235 = vpop.f32.mrb[0].mxu0
        %v2236 = vpop.f32.mrb[0].mxu0
        %v2237 = vadd.f32 %v2188, %v2236
        %v2238 = vpop.f32.mrb[0].mxu0
        %2239 = vdwg.mxu0
        %2240 = vmatprep.subr.bf16.mxu0 0
        %2241 = vmatpush1.bf16.msra.mxu0 %v2077
        %2242 = vmatprep.subr.bf16.mxu0 0
        %2243 = vmatpush1.bf16.msra.mxu0 %v2078
        %2244 = vmatprep.subr.bf16.mxu0 0
        %2245 = vmatpush1.bf16.msra.mxu0 %v2079
        %2246 = vmatprep.subr.bf16.mxu0 0
        %2247 = vmatpush1.bf16.msra.mxu0 %v2080
        %2248 = vmatprep.subr.bf16.mxu0 0
        %2249 = vmatpush1.bf16.msra.mxu0 %v2081
        %2250 = vmatprep.subr.bf16.mxu0 0
        %2251 = vmatpush1.bf16.msra.mxu0 %v2082
        %2252 = vmatprep.subr.bf16.mxu0 0
        %2253 = vmatpush1.bf16.msra.mxu0 %v2083
        %2254 = vmatprep.subr.bf16.mxu0 0
        %2255 = vmatpush1.bf16.msra.mxu0 %v2084
        %2256 = vmatprep.subr.bf16.mxu0 0
        %2257 = vmatpush1.bf16.msra.mxu0 %v2085
        %2258 = vmatprep.subr.bf16.mxu0 0
        %2259 = vmatpush1.bf16.msra.mxu0 %v2086
        %2260 = vmatprep.subr.bf16.mxu0 0
        %2261 = vmatpush1.bf16.msra.mxu0 %v2087
        %2262 = vmatprep.subr.bf16.mxu0 0
        %2263 = vmatpush1.bf16.msra.mxu0 %v2088
        %2264 = vmatprep.subr.bf16.mxu0 0
        %2265 = vmatpush1.bf16.msra.mxu0 %v2089
        %2266 = vmatprep.subr.bf16.mxu0 0
        %2267 = vmatpush1.bf16.msra.mxu0 %v2090
        %2268 = vmatprep.subr.bf16.mxu0 0
        %2269 = vmatpush1.bf16.msra.mxu0 %v2091
        %2270 = vmatprep.subr.bf16.mxu0 0
        %2271 = vmatpush1.bf16.msra.mxu0 %v2092
        %2272 = vmatprep.mubr.bf16.mxu0 %v2016
        %2273 = vmatmul.mubr.bf16.gmra.mrb[0].mxu0 %v2015
        %v2274 = vpop.f32.mrb[0].mxu0
        %v2275 = vadd.f32 %v2226, %v2274
        %v2276 = vpop.f32.mrb[0].mxu0
        %v2277 = vpop.f32.mrb[0].mxu0
        %v2278 = vadd.f32 %v2229, %v2277
        %v2279 = vpop.f32.mrb[0].mxu0
        %2280 = vmatprep.mubr.bf16.mxu0 %v2024
        %2281 = vmatmul.mubr.bf16.gmra.mrb[0].mxu0 %v2023
        %v2282 = vpop.f32.mrb[0].mxu0
        %v2283 = vadd.f32 %v2234, %v2282
        %v2284 = vpop.f32.mrb[0].mxu0
        %v2285 = vpop.f32.mrb[0].mxu0
        %v2286 = vadd.f32 %v2237, %v2285
        %v2287 = vpop.f32.mrb[0].mxu0
        %2288 = vdwg.mxu0
        %v2289 = vadd.f32 %v2025, %v2275
        %v2290 = vadd.f32 %v2026, %v2278
        %v2291 = vadd.f32 %v2027, %v2283
        %v2292 = vadd.f32 %v2028, %v2286
        %2293 = vst [vmem:[%s476] sm:$0xff] %v2289
        %2294 = vst [vmem:[%s476 + $0x8] sm:$0xff] %v2290
        %2295 = vst [vmem:[%s476 + $0x10] sm:$0xff] %v2291
        %2296 = vst [vmem:[%s476 + $0x18] sm:$0xff] %v2292
        %s2297 = sld [smem:[#allocation6 + %s50]]
        %p2298 = scmp.eq.s32.totalorder %s2297, 1
        // Predicated region
        $region73: #{tpu_custom_call.1} parent=47 // pred_check
          %p2299 = pneg %p2298
        $region74: #{tpu_custom_call.1} parent=47 // pred_check_branch
          %2301 = sbr.rel (%p2299) target = $region76
        $region75: #{tpu_custom_call.1} parent=47 // pred_region
          %v2302 = vld [vmem:[%s476] sm:$0xff]
          %v2303 = vld [vmem:[%s476 + $0x8] sm:$0xff]
          %v2304 = vld [vmem:[%s476 + $0x10] sm:$0xff]
          %v2305 = vld [vmem:[%s476 + $0x18] sm:$0xff]
          %v2306 = vld [vmem:[%s9] sm:$0x1]
          %v2308 = vlaneseq
          %v2309 = vshrl.u32 %v2308, 7
          %v2310 = vsub.s32 0, %v2309
          %v2311 = vrot.slane %v2306, %v2310
          %v2313 = vmul.f32 %v2302, %v2311
          %v2314 = vmul.f32 %v2303, %v2311
          %v2315 = vmul.f32 %v2304, %v2311
          %v2316 = vmul.f32 %v2305, %v2311
          %v2317 = vld [vmem:[%s10] sm:$0x1]
          %v2319 = vlaneseq
          %v2320 = vshrl.u32 %v2319, 7
          %v2321 = vsub.s32 0, %v2320
          %v2322 = vrot.slane %v2317, %v2321
          %v2324 = vadd.f32 %v2313, %v2322
          %v2325 = vadd.f32 %v2314, %v2322
          %v2326 = vadd.f32 %v2315, %v2322
          %v2327 = vadd.f32 %v2316, %v2322
          %v2328 = vmax.f32 %v2324, 0.0
          %v2329 = vmax.f32 %v2325, 0.0
          %v2330 = vmax.f32 %v2326, 0.0
          %v2331 = vmax.f32 %v2327, 0.0
          %2332 = vst [vmem:[%s476] sm:$0xff] %v2328
          %2333 = vst [vmem:[%s476 + $0x8] sm:$0xff] %v2329
          %2334 = vst [vmem:[%s476 + $0x10] sm:$0xff] %v2330
          %2335 = vst [vmem:[%s476 + $0x18] sm:$0xff] %v2331
        $region76: #{tpu_custom_call.1} parent=47 // pred_fallthru
          _
        %s2336 = sand.u32 %s236, 1
        %s2337 = scalar_lea.sflag [#allocation9], %s2336
        %s2338 = sand.u32 %s236, 1
        %s2339 = smul.addr %s2338, 32
        %s2340 = scalar_lea.vmem [#allocation16], %s2339
        // Predicated region
        $region77: #{tpu_custom_call.1} parent=47 // pred_check
          %p2341 = pneg %p246
        $region78: #{tpu_custom_call.1} parent=47 // pred_check_branch
          %2343 = sbr.rel (%p2341) target = $region80
        $region79: #{tpu_custom_call.1} parent=47 // pred_region
          %s2344 = sld [smem:[#allocation3 + %s50]]
          %s2345 = smul.u32 4, %s2344
          %s2347 = ssub.s32 512, 512
          %2348 = vsyncadd %s2337, %s2347
          %s2349 = smul.addr %s2345, 128
          %s2350 = scalar_lea.hbm %s11, %s2349
          %s2351 = sshll.u32 %s2340, 4
          %s2352 = int_to_ptr.vmem [resolvable:$true] %s2351
          %2357 = dma.vmem_to_hbm [thread:$0]  %s2352, 512, %s2350, %s2337, 128, 128, 8
        $region80: #{tpu_custom_call.1} parent=47 // pred_fallthru
          _
      $region48: #{tpu_custom_call.1} parent=5 // pred_fallthru
        _
      %p2358 = scmp.le.s32.totalorder 2, %s45
      // Predicated region
      $region81: #{tpu_custom_call.1} parent=5 // pred_check
        %p2359 = pneg %p2358
      $region82: #{tpu_custom_call.1} parent=5 // pred_check_branch
        %2361 = sbr.rel (%p2359) target = $region84
      $region83: #{tpu_custom_call.1} parent=5 // pred_region
        %s2362 = ssub.s32 %s45, 2
        // Predicated region
        $region85: #{tpu_custom_call.1} parent=83 // pred_check
          %p2363 = pneg %p252
        $region86: #{tpu_custom_call.1} parent=83 // pred_check_branch
          %2365 = sbr.rel (%p2363) target = $region88
        $region87: #{tpu_custom_call.1} parent=83 // pred_region
          %s2366 = sand.u32 %s237, 1
          %s2367 = scalar_lea.sflag [#allocation9], %s2366
          %s2368 = sand.u32 %s237, 1
          %s2369 = smul.addr %s2368, 32
          %s2370 = scalar_lea.vmem [#allocation16], %s2369
          %2371 = dma.done %s2367, 512
        $region88: #{tpu_custom_call.1} parent=83 // pred_fallthru
          _
      $region84: #{tpu_custom_call.1} parent=5 // pred_fallthru
        _
    $region6: #{tpu_custom_call.1} parent=1 // loop_footer
      %s49 = sadd.s32 1, %s45
    $region7: #{tpu_custom_call.1} parent=1 // loop_footer_branch
      %44 = sbr.rel target = $region3
    $region8: #{tpu_custom_call.1} parent=1 // loop_exit
      _
    %2372 = vsyncpa [#allocation8], 1
    %s2373 = scalar_lea.sflag [#allocation8], 1
    %2374 = vsyncpa %s2373, 1
    %2375 = vsyncpa [#allocation11], 1
    %s2376 = scalar_lea.sflag [#allocation11], 1
    %2377 = vsyncpa %s2376, 1
    %2378 = vsyncpa [#allocation14], 1
    %s2379 = scalar_lea.sflag [#allocation14], 1
    %2380 = vsyncpa %s2379, 1
    %2381 = vsyncpa [#allocation9], 1
    %s2382 = scalar_lea.sflag [#allocation9], 1
    %2383 = vsyncpa %s2382, 1

</llo_original>
